<compile_context>
chip_gen: v7x
topology: tpu7x:2x2x1
jax: 0.10.0
libtpu: 0.0.40
codegen_flags: <defaults>
</compile_context>

<pallas_src>
from functools import partial

import numpy as np
import jax
import jax.numpy as jnp
from jax.experimental import pallas as pl
from jax.experimental.pallas import tpu as pltpu

# ----------------------- stand-in for the undefined `config` module -----------------------
WINDOW_SIZE = 64          # n_fft == win_length
HOP_SIZE = 32
SAMPLE_RATE = 16000
FMIN = 0.0
FMAX = 8000.0
REF = 1.0
AMIN = 1e-10
TOP_DB = 80.0
# TODO(synk): exact torchlibrosa Spectrogram/LogmelFilterBank config is not available
# (the original `config` module is undefined); a faithful STFT-power + mel + log-power
# pipeline is implemented with the stand-in constants above (HTK mel scale).

# model sizes
FEATURE_SIZE = 16         # n_mels == encoder LSTM input size
HIDDEN_SIZE = 32
VOCAB_SIZE = 40
DECODER_INPUT_SIZE = HIDDEN_SIZE   # must equal hidden_size for the PyTorch forward to work

_LN10 = float(np.log(10.0))


def _round_up(x, m):
    return ((x + m - 1) // m) * m


# =============================== Pallas kernel ===============================

def _lstm_gates(gates, c_prev, hidden):
    """LSTM activations, gate column order [i, f, o, g] (reordered offline).
    Activations are applied over the full 128-lane vreg (EUP cost is per-vreg) and the
    results are sliced afterwards; sigmoid uses an approx-reciprocal on the EUP."""
    H = hidden
    sig = pl.reciprocal(1.0 + jnp.exp(-gates), approx=True)   # sigmoid over all lanes
    tg = jnp.tanh(gates)                                      # tanh over all lanes
    i_g = sig[:, 0 * H:1 * H]
    f_g = sig[:, 1 * H:2 * H]
    o_g = sig[:, 2 * H:3 * H]
    g_g = tg[:, 3 * H:4 * H]
    c_new = f_g * c_prev + i_g * g_g
    h_new = o_g * jnp.tanh(c_new)
    return h_new, c_new


def _fused_forward_kernel(ids_ref,
                          frames_ref, dft_ref, mel2_ref,
                          ewih_ref, ewhh_ref, eb_ref,
                          emb_ref, dwih_ref, dwhh_ref, db_ref,
                          fcw_ref, fcb_ref,
                          out_ref,
                          egx_s, dgx_s, demb_s,
                          *, batch, t_enc, t_dec, hidden, amin, ref_db, top_db):
    H = hidden
    B = batch
    bf16 = jnp.bfloat16

    # ---------------- front-end: windowed DFT power -> mel -> log-power ----------------
    # dft_ref packs [window*cos | 0 | -window*sin | 0]; mel2_ref = [mel; mel] so the
    # re^2 + im^2 half-sum is folded into the mel matmul (no lane slicing).
    spec = jnp.dot(frames_ref[...].astype(bf16), dft_ref[...],
                   preferred_element_type=jnp.float32)           # (T_enc*B, 2*half) f32
    sq = spec * spec                                             # full-width square
    mel = jnp.dot(sq.astype(bf16), mel2_ref[...],
                  preferred_element_type=jnp.float32)            # (T_enc*B, F) f32
    logmel = (10.0 / _LN10) * jnp.log(jnp.maximum(mel, amin))
    if ref_db != 0.0:                                            # ref_db == 0 for REF=1: folded
        logmel = logmel - ref_db
    if top_db is not None:                                       # tensor-wide top_db clamp
        gmax = jnp.max(jnp.max(logmel, axis=1, keepdims=True), axis=0, keepdims=True)
        logmel = jnp.maximum(logmel, gmax - top_db)

    # ---------------- hoisted encoder input projection -> VMEM scratch ----------------
    egx_s[...] = (jnp.dot(logmel.astype(bf16), ewih_ref[...],
                          preferred_element_type=jnp.float32) + eb_ref[...])

    # ---------------- in-kernel teacher-forcing embedding gather ----------------
    # PyTorch loop: step 0 and step 1 both consume ids[:, 0]; step t>=1 consumes ids[:, t-1].
    for t in range(t_dec):
        src = 0 if t == 0 else t - 1
        for b in range(B):
            idx = ids_ref[b, src]                                # SMEM scalar
            demb_s[pl.ds(t * B + b, 1), :] = emb_ref[pl.ds(idx, 1), :]

    # ---------------- hoisted decoder input projection -> VMEM scratch ----------------
    dgx_s[...] = (jnp.dot(demb_s[...].astype(bf16), dwih_ref[...],
                          preferred_element_type=jnp.float32) + db_ref[...])

    # ---------------- encoder LSTM (h0 = c0 = 0); static unroll, h/c in vregs ----------------
    ewhh = ewhh_ref[...]                                         # (H, 4H) bf16
    h = jnp.zeros((B, H), jnp.float32)
    c = jnp.zeros((B, H), jnp.float32)
    for t in range(t_enc):
        gates = egx_s[t * B:(t + 1) * B, :] + jnp.dot(
            h.astype(bf16), ewhh, preferred_element_type=jnp.float32)
        h, c = _lstm_gates(gates, c, H)

    # ---------------- decoder LSTM (teacher-forced); per-step fc written to out ----------------
    dwhh = dwhh_ref[...]                                         # (H, 4H) bf16
    fcw = fcw_ref[...]                                           # (H, Vp) bf16
    fcb = fcb_ref[...]                                           # (1, Vp) f32
    for t in range(t_dec):
        gates = dgx_s[t * B:(t + 1) * B, :] + jnp.dot(
            h.astype(bf16), dwhh, preferred_element_type=jnp.float32)
        h, c = _lstm_gates(gates, c, H)
        out_ref[t * B:(t + 1) * B, :] = (jnp.dot(
            h.astype(bf16), fcw, preferred_element_type=jnp.float32) + fcb)


# =============================== Pallas wrapper ===============================

def fused_forward_pallas(ids, frames_tm, dft_mat, mel2_mat,
                         ewih, ewhh, eb,
                         emb, dwih, dwhh, db,
                         fcw, fcb,
                         *, batch, t_enc, t_dec):
    H = ewhh.shape[0]
    Vp = fcw.shape[1]
    ref_db = 10.0 * float(np.log10(max(AMIN, REF)))

    kernel = partial(_fused_forward_kernel, batch=batch, t_enc=t_enc, t_dec=t_dec,
                     hidden=H, amin=AMIN, ref_db=ref_db, top_db=TOP_DB)

    def full(shape):
        n = len(shape)
        # index_map receives (grid_idx, scalar_prefetch_ref)
        return pl.BlockSpec(shape, lambda i, ids_ref, _n=n: (0,) * _n)

    inputs = (frames_tm, dft_mat, mel2_mat, ewih, ewhh, eb, emb, dwih, dwhh, db, fcw, fcb)

    return pl.pallas_call(
        kernel,
        out_shape=jax.ShapeDtypeStruct((t_dec * batch, Vp), jnp.float32),
        grid_spec=pltpu.PrefetchScalarGridSpec(
            num_scalar_prefetch=1,
            grid=(1,),
            in_specs=[full(x.shape) for x in inputs],
            out_specs=full((t_dec * batch, Vp)),
            scratch_shapes=[pltpu.VMEM((t_enc * batch, 4 * H), jnp.float32),   # egx
                            pltpu.VMEM((t_dec * batch, 4 * H), jnp.float32),   # dgx
                            pltpu.VMEM((t_dec * batch, H), jnp.float32)]),     # gathered emb
        compiler_params=pltpu.CompilerParams(dimension_semantics=("arbitrary",)),
    )(ids, *inputs)


# =============================== frozen front-end matrices ===============================

def _hz_to_mel(f):
    return 2595.0 * np.log10(1.0 + f / 700.0)


def _mel_to_hz(m):
    return 700.0 * (10.0 ** (m / 2595.0) - 1.0)


def make_frontend_matrices():
    """Returns (dft_mat, mel2_mat) as bf16:
       dft_mat  : (W, 2*half)  [window*cos | 0-pad | -window*sin | 0-pad], half >= n_bins
       mel2_mat : (2*half, n_mels) == [mel; mel] so power = re^2+im^2 folds into the matmul."""
    n = np.arange(WINDOW_SIZE)
    k = np.arange(WINDOW_SIZE // 2 + 1)
    n_bins = WINDOW_SIZE // 2 + 1
    window = 0.5 - 0.5 * np.cos(2.0 * np.pi * n / WINDOW_SIZE)   # periodic Hann
    ang = 2.0 * np.pi * np.outer(n, k) / WINDOW_SIZE

    half = _round_up(n_bins, 64)                                  # 2*half is a multiple of 128
    dft = np.zeros((WINDOW_SIZE, 2 * half), dtype=np.float32)
    dft[:, :n_bins] = window[:, None] * np.cos(ang)
    dft[:, half:half + n_bins] = -window[:, None] * np.sin(ang)

    fft_freqs = np.linspace(0.0, SAMPLE_RATE / 2.0, n_bins)
    mel_pts = np.linspace(_hz_to_mel(FMIN), _hz_to_mel(FMAX), FEATURE_SIZE + 2)
    hz_pts = _mel_to_hz(mel_pts)
    fb = np.zeros((FEATURE_SIZE, n_bins), dtype=np.float64)
    for m in range(1, FEATURE_SIZE + 1):
        lo, ce, hi = hz_pts[m - 1], hz_pts[m], hz_pts[m + 1]
        lower = (fft_freqs - lo) / max(ce - lo, 1e-12)
        upper = (hi - fft_freqs) / max(hi - ce, 1e-12)
        fb[m - 1] = np.maximum(0.0, np.minimum(lower, upper))
    enorm = 2.0 / (hz_pts[2:FEATURE_SIZE + 2] - hz_pts[:FEATURE_SIZE])   # slaney norm
    fb *= enorm[:, None]

    mel_half = np.zeros((half, FEATURE_SIZE), dtype=np.float32)
    mel_half[:n_bins, :] = fb.T.astype(np.float32)
    mel2 = np.concatenate([mel_half, mel_half], axis=0)           # (2*half, F)

    return (jnp.asarray(dft, dtype=jnp.bfloat16),
            jnp.asarray(mel2, dtype=jnp.bfloat16))


# =============================== parameters ===============================

def _reorder_gates(w, hidden):
    """PyTorch gate column order [i, f, g, o] -> kernel order [i, f, o, g]."""
    H = hidden
    i = w[..., 0 * H:1 * H]
    f = w[..., 1 * H:2 * H]
    g = w[..., 2 * H:3 * H]
    o = w[..., 3 * H:4 * H]
    return jnp.concatenate([i, f, o, g], axis=-1)


def init_params(key):
    ks = jax.random.split(key, 11)
    H, F, V, DIN = HIDDEN_SIZE, FEATURE_SIZE, VOCAB_SIZE, DECODER_INPUT_SIZE
    bnd = 1.0 / np.sqrt(H)

    def u(k, shape):
        return jax.random.uniform(k, shape, jnp.float32, -bnd, bnd)

    # raw weights in PyTorch gate order [i, f, g, o] (transposed: (in, 4H))
    enc_wih = u(ks[0], (F, 4 * H))
    enc_whh = u(ks[1], (H, 4 * H))
    enc_b = u(ks[2], (1, 4 * H)) + u(ks[3], (1, 4 * H))        # b_ih + b_hh
    emb = jax.random.normal(ks[4], (V, H), jnp.float32)        # PyTorch default N(0,1)
    dec_wih = u(ks[5], (DIN, 4 * H))
    dec_whh = u(ks[6], (H, 4 * H))
    dec_b = u(ks[7], (1, 4 * H)) + u(ks[8], (1, 4 * H))
    fc_w = u(ks[9], (H, V))
    fc_b = u(ks[10], (1, V))

    v_pad = _round_up(V, 128)
    fc_w_pad = jnp.zeros((H, v_pad), jnp.float32).at[:, :V].set(fc_w)
    fc_b_pad = jnp.zeros((1, v_pad), jnp.float32).at[:, :V].set(fc_b)

    bf16 = jnp.bfloat16
    return {
        # MXU-only operands stored in bf16 (f32 accumulation inside the kernel)
        "enc_wih": _reorder_gates(enc_wih, H).astype(bf16),
        "enc_whh": _reorder_gates(enc_whh, H).astype(bf16),
        "enc_b": _reorder_gates(enc_b, H),                     # f32 bias (VPU add)
        "emb": emb,                                            # f32 table (dynamic row gather)
        "dec_wih": _reorder_gates(dec_wih, H).astype(bf16),
        "dec_whh": _reorder_gates(dec_whh, H).astype(bf16),
        "dec_b": _reorder_gates(dec_b, H),
        "fc_w_pad": fc_w_pad.astype(bf16),
        "fc_b_pad": fc_b_pad,
    }


# =============================== full forward ===============================

def _frame_signal(padded, win, hop):
    """(B, Lp) -> (B, T, win) frames.  When hop == win/2 and Lp % hop == 0 this is a
    pure reshape+concat (no gather)."""
    Bp, Lp = padded.shape
    T = (Lp - win) // hop + 1
    if win == 2 * hop and Lp % hop == 0 and (T + 1) * hop <= Lp:
        blocks = padded.reshape(Bp, Lp // hop, hop)
        return jnp.concatenate([blocks[:, :T, :], blocks[:, 1:T + 1, :]], axis=2)
    idx = hop * jnp.arange(T)[:, None] + jnp.arange(win)[None, :]
    return padded[:, idx]


def encoder_decoder_forward(waveform, note_events_ids, params, frontend):
    dft_mat, mel2_mat = frontend
    B, L = waveform.shape

    # ---- framing (Spectrogram center=True, reflect pad); window folded into dft_mat ----
    pad = WINDOW_SIZE // 2
    padded = jnp.pad(waveform, ((0, 0), (pad, pad)), mode="reflect")
    frames = _frame_signal(padded, WINDOW_SIZE, HOP_SIZE)            # (B, T_enc, W)
    T_enc = frames.shape[1]
    frames_tm = jnp.transpose(frames, (1, 0, 2)).reshape(T_enc * B, WINDOW_SIZE)

    # ---- decoder ids go straight into the kernel (SMEM scalar prefetch) ----
    ids = note_events_ids.astype(jnp.int32)                          # (B, T_dec)
    T_dec = ids.shape[1]

    # ---- fused front-end + embedding gather + encoder LSTM + decoder LSTM + fc ----
    out_flat = fused_forward_pallas(
        ids, frames_tm, dft_mat, mel2_mat,
        params["enc_wih"], params["enc_whh"], params["enc_b"],
        params["emb"],
        params["dec_wih"], params["dec_whh"], params["dec_b"],
        params["fc_w_pad"], params["fc_b_pad"],
        batch=B, t_enc=T_enc, t_dec=T_dec)                           # (T_dec*B, V_pad)

    v_pad = params["fc_w_pad"].shape[1]
    out = out_flat.reshape(T_dec, B, v_pad).transpose(1, 0, 2)[:, :, :VOCAB_SIZE]
    return out                                                       # (B, T_dec, vocab)


# =============================== main ===============================

if __name__ == "__main__":
    B = 2
    T_DEC = 6
    L = WINDOW_SIZE + 7 * HOP_SIZE                                   # 288 samples -> 10 STFT frames

    key = jax.random.PRNGKey(0)
    k_param, k_wave, k_ids = jax.random.split(key, 3)

    params = init_params(k_param)
    frontend = make_frontend_matrices()

    waveform = jax.random.normal(k_wave, (B, L), jnp.float32)
    note_events_ids = jax.random.randint(k_ids, (B, T_DEC), 0, VOCAB_SIZE, jnp.int32)

    fwd = jax.jit(partial(encoder_decoder_forward, params=params, frontend=frontend))
    outputs = fwd(waveform, note_events_ids)
    outputs = jax.block_until_ready(outputs)

    assert outputs.shape == (B, T_DEC, VOCAB_SIZE), outputs.shape
    assert bool(jnp.all(jnp.isfinite(outputs)))
    print("KERNEL_OK")
</pallas_src>

<mosaic_0001>
module attributes {stable_mosaic.version = 11 : i64} {
  func.func @_fused_forward_kernel(%arg0: i32, %arg1: memref<2x6xi32, #tpu.memory_space<smem>>, %arg2: memref<20x64xf32, #tpu.memory_space<vmem>>, %arg3: memref<64x128xbf16, #tpu.memory_space<vmem>>, %arg4: memref<128x16xbf16, #tpu.memory_space<vmem>>, %arg5: memref<16x128xbf16, #tpu.memory_space<vmem>>, %arg6: memref<32x128xbf16, #tpu.memory_space<vmem>>, %arg7: memref<1x128xf32, #tpu.memory_space<vmem>>, %arg8: memref<40x32xf32, #tpu.memory_space<vmem>>, %arg9: memref<32x128xbf16, #tpu.memory_space<vmem>>, %arg10: memref<32x128xbf16, #tpu.memory_space<vmem>>, %arg11: memref<1x128xf32, #tpu.memory_space<vmem>>, %arg12: memref<32x128xbf16, #tpu.memory_space<vmem>>, %arg13: memref<1x128xf32, #tpu.memory_space<vmem>>, %arg14: memref<12x128xf32, #tpu.memory_space<vmem>>, %arg15: memref<20x128xf32, #tpu.memory_space<vmem>>, %arg16: memref<12x128xf32, #tpu.memory_space<vmem>>, %arg17: memref<12x32xf32, #tpu.memory_space<vmem>>) attributes {dimension_semantics = [#tpu.dimension_semantics<arbitrary>], iteration_bounds = array<i64: 1>, scalar_prefetch = 1 : i64, scratch_operands = 3 : i64, tpu.core_type = #tpu.core_type<tc>, window_params = [{pipeline_mode = #tpu.pipeline_mode<synchronous>, transform_indices = @transform_0, window_bounds = array<i64: 20, 64>}, {pipeline_mode = #tpu.pipeline_mode<synchronous>, transform_indices = @transform_1, window_bounds = array<i64: 64, 128>}, {pipeline_mode = #tpu.pipeline_mode<synchronous>, transform_indices = @transform_2, window_bounds = array<i64: 128, 16>}, {pipeline_mode = #tpu.pipeline_mode<synchronous>, transform_indices = @transform_3, window_bounds = array<i64: 16, 128>}, {pipeline_mode = #tpu.pipeline_mode<synchronous>, transform_indices = @transform_4, window_bounds = array<i64: 32, 128>}, {pipeline_mode = #tpu.pipeline_mode<synchronous>, transform_indices = @transform_5, window_bounds = array<i64: 1, 128>}, {pipeline_mode = #tpu.pipeline_mode<synchronous>, transform_indices = @transform_6, window_bounds = array<i64: 40, 32>}, {pipeline_mode = #tpu.pipeline_mode<synchronous>, transform_indices = @transform_7, window_bounds = array<i64: 32, 128>}, {pipeline_mode = #tpu.pipeline_mode<synchronous>, transform_indices = @transform_8, window_bounds = array<i64: 32, 128>}, {pipeline_mode = #tpu.pipeline_mode<synchronous>, transform_indices = @transform_9, window_bounds = array<i64: 1, 128>}, {pipeline_mode = #tpu.pipeline_mode<synchronous>, transform_indices = @transform_10, window_bounds = array<i64: 32, 128>}, {pipeline_mode = #tpu.pipeline_mode<synchronous>, transform_indices = @transform_11, window_bounds = array<i64: 1, 128>}, {pipeline_mode = #tpu.pipeline_mode<synchronous>, transform_indices = @transform_12, window_bounds = array<i64: 12, 128>}]} {
    %c0 = arith.constant 0 : index
    %c0_0 = arith.constant 0 : index
    %0 = vector.load %arg2[%c0, %c0_0] : memref<20x64xf32, #tpu.memory_space<vmem>>, vector<20x64xf32>
    %1 = arith.truncf %0 : vector<20x64xf32> to vector<20x64xbf16>
    %c0_1 = arith.constant 0 : index
    %c0_2 = arith.constant 0 : index
    %2 = vector.load %arg3[%c0_1, %c0_2] : memref<64x128xbf16, #tpu.memory_space<vmem>>, vector<64x128xbf16>
    %cst = arith.constant dense<0.000000e+00> : vector<20x128xf32>
    %3 = tpu.matmul %1, %2, %cst {dimension_numbers = #tpu.dot_dimension_numbers<[1], [0], [0], [1], [0, 0, 1, 1], [], []>} : vector<20x64xbf16>, vector<64x128xbf16>, vector<20x128xf32> -> vector<20x128xf32>
    %4 = arith.mulf %3, %3 : vector<20x128xf32>
    %5 = arith.truncf %4 : vector<20x128xf32> to vector<20x128xbf16>
    %c0_3 = arith.constant 0 : index
    %c0_4 = arith.constant 0 : index
    %6 = vector.load %arg4[%c0_3, %c0_4] : memref<128x16xbf16, #tpu.memory_space<vmem>>, vector<128x16xbf16>
    %cst_5 = arith.constant dense<0.000000e+00> : vector<20x16xf32>
    %7 = tpu.matmul %5, %6, %cst_5 {dimension_numbers = #tpu.dot_dimension_numbers<[1], [0], [0], [1], [0, 0, 1, 1], [], []>} : vector<20x128xbf16>, vector<128x16xbf16>, vector<20x16xf32> -> vector<20x16xf32>
    %cst_6 = arith.constant 1.000000e-10 : f32
    %8 = vector.broadcast %cst_6 : f32 to vector<20x16xf32>
    %9 = arith.maximumf %7, %8 : vector<20x16xf32>
    %10 = math.log %9 : vector<20x16xf32>
    %cst_7 = arith.constant 4.34294462 : f32
    %11 = vector.broadcast %cst_7 : f32 to vector<20x16xf32>
    %12 = arith.mulf %11, %10 : vector<20x16xf32>
    %cst_8 = arith.constant dense<0xFF800000> : vector<20xf32>
    %13 = vector.multi_reduction <maximumf>, %12, %cst_8 [1] : vector<20x16xf32> to vector<20xf32>
    %14 = vector.shape_cast %13 : vector<20xf32> to vector<20x1xf32>
    %cst_9 = arith.constant dense<0xFF800000> : vector<1xf32>
    %15 = vector.multi_reduction <maximumf>, %14, %cst_9 [0] : vector<20x1xf32> to vector<1xf32>
    %16 = vector.shape_cast %15 : vector<1xf32> to vector<1x1xf32>
    %cst_10 = arith.constant 8.000000e+01 : f32
    %17 = vector.broadcast %cst_10 : f32 to vector<1x1xf32>
    %18 = arith.subf %16, %17 : vector<1x1xf32>
    %19 = vector.broadcast %18 : vector<1x1xf32> to vector<20x16xf32>
    %20 = arith.maximumf %12, %19 : vector<20x16xf32>
    %21 = arith.truncf %20 : vector<20x16xf32> to vector<20x16xbf16>
    %c0_11 = arith.constant 0 : index
    %c0_12 = arith.constant 0 : index
    %22 = vector.load %arg5[%c0_11, %c0_12] : memref<16x128xbf16, #tpu.memory_space<vmem>>, vector<16x128xbf16>
    %cst_13 = arith.constant dense<0.000000e+00> : vector<20x128xf32>
    %23 = tpu.matmul %21, %22, %cst_13 {dimension_numbers = #tpu.dot_dimension_numbers<[1], [0], [0], [1], [0, 0, 1, 1], [], []>} : vector<20x16xbf16>, vector<16x128xbf16>, vector<20x128xf32> -> vector<20x128xf32>
    %c0_14 = arith.constant 0 : index
    %c0_15 = arith.constant 0 : index
    %24 = vector.load %arg7[%c0_14, %c0_15] : memref<1x128xf32, #tpu.memory_space<vmem>>, vector<1x128xf32>
    %25 = vector.broadcast %24 : vector<1x128xf32> to vector<20x128xf32>
    %26 = arith.addf %23, %25 : vector<20x128xf32>
    %c0_16 = arith.constant 0 : index
    %c0_17 = arith.constant 0 : index
    %27 = vector.load %arg15[%c0_16, %c0_17] : memref<20x128xf32, #tpu.memory_space<vmem>>, vector<20x128xf32>
    tpu.vector_store %arg15[%c0_16, %c0_17], %26 {strides = array<i32>} : memref<20x128xf32, #tpu.memory_space<vmem>>, vector<20x128xf32>,
    %c0_18 = arith.constant 0 : index
    %c0_19 = arith.constant 0 : index
    %28 = memref.load %arg1[%c0_18, %c0_19] : memref<2x6xi32, #tpu.memory_space<smem>>
    %29 = arith.index_cast %28 : i32 to index
    %c0_20 = arith.constant 0 : index
    %30 = vector.load %arg8[%29, %c0_20] : memref<40x32xf32, #tpu.memory_space<vmem>>, vector<1x32xf32>
    %c0_21 = arith.constant 0 : index
    %c0_22 = arith.constant 0 : index
    %31 = vector.load %arg17[%c0_21, %c0_22] : memref<12x32xf32, #tpu.memory_space<vmem>>, vector<1x32xf32>
    tpu.vector_store %arg17[%c0_21, %c0_22], %30 {strides = array<i32>} : memref<12x32xf32, #tpu.memory_space<vmem>>, vector<1x32xf32>,
    %c1 = arith.constant 1 : index
    %c0_23 = arith.constant 0 : index
    %32 = memref.load %arg1[%c1, %c0_23] : memref<2x6xi32, #tpu.memory_space<smem>>
    %33 = arith.index_cast %32 : i32 to index
    %c0_24 = arith.constant 0 : index
    %34 = vector.load %arg8[%33, %c0_24] : memref<40x32xf32, #tpu.memory_space<vmem>>, vector<1x32xf32>
    %c1_25 = arith.constant 1 : index
    %c0_26 = arith.constant 0 : index
    %35 = vector.load %arg17[%c1_25, %c0_26] : memref<12x32xf32, #tpu.memory_space<vmem>>, vector<1x32xf32>
    tpu.vector_store %arg17[%c1_25, %c0_26], %34 {strides = array<i32>} : memref<12x32xf32, #tpu.memory_space<vmem>>, vector<1x32xf32>,
    %c0_27 = arith.constant 0 : index
    %c0_28 = arith.constant 0 : index
    %36 = memref.load %arg1[%c0_27, %c0_28] : memref<2x6xi32, #tpu.memory_space<smem>>
    %37 = arith.index_cast %36 : i32 to index
    %c0_29 = arith.constant 0 : index
    %38 = vector.load %arg8[%37, %c0_29] : memref<40x32xf32, #tpu.memory_space<vmem>>, vector<1x32xf32>
    %c2 = arith.constant 2 : index
    %c0_30 = arith.constant 0 : index
    %39 = vector.load %arg17[%c2, %c0_30] : memref<12x32xf32, #tpu.memory_space<vmem>>, vector<1x32xf32>
    tpu.vector_store %arg17[%c2, %c0_30], %38 {strides = array<i32>} : memref<12x32xf32, #tpu.memory_space<vmem>>, vector<1x32xf32>,
    %c1_31 = arith.constant 1 : index
    %c0_32 = arith.constant 0 : index
    %40 = memref.load %arg1[%c1_31, %c0_32] : memref<2x6xi32, #tpu.memory_space<smem>>
    %41 = arith.index_cast %40 : i32 to index
    %c0_33 = arith.constant 0 : index
    %42 = vector.load %arg8[%41, %c0_33] : memref<40x32xf32, #tpu.memory_space<vmem>>, vector<1x32xf32>
    %c3 = arith.constant 3 : index
    %c0_34 = arith.constant 0 : index
    %43 = vector.load %arg17[%c3, %c0_34] : memref<12x32xf32, #tpu.memory_space<vmem>>, vector<1x32xf32>
    tpu.vector_store %arg17[%c3, %c0_34], %42 {strides = array<i32>} : memref<12x32xf32, #tpu.memory_space<vmem>>, vector<1x32xf32>,
    %c0_35 = arith.constant 0 : index
    %c1_36 = arith.constant 1 : index
    %44 = memref.load %arg1[%c0_35, %c1_36] : memref<2x6xi32, #tpu.memory_space<smem>>
    %45 = arith.index_cast %44 : i32 to index
    %c0_37 = arith.constant 0 : index
    %46 = vector.load %arg8[%45, %c0_37] : memref<40x32xf32, #tpu.memory_space<vmem>>, vector<1x32xf32>
    %c4 = arith.constant 4 : index
    %c0_38 = arith.constant 0 : index
    %47 = vector.load %arg17[%c4, %c0_38] : memref<12x32xf32, #tpu.memory_space<vmem>>, vector<1x32xf32>
    tpu.vector_store %arg17[%c4, %c0_38], %46 {strides = array<i32>} : memref<12x32xf32, #tpu.memory_space<vmem>>, vector<1x32xf32>,
    %c1_39 = arith.constant 1 : index
    %c1_40 = arith.constant 1 : index
    %48 = memref.load %arg1[%c1_39, %c1_40] : memref<2x6xi32, #tpu.memory_space<smem>>
    %49 = arith.index_cast %48 : i32 to index
    %c0_41 = arith.constant 0 : index
    %50 = vector.load %arg8[%49, %c0_41] : memref<40x32xf32, #tpu.memory_space<vmem>>, vector<1x32xf32>
    %c5 = arith.constant 5 : index
    %c0_42 = arith.constant 0 : index
    %51 = vector.load %arg17[%c5, %c0_42] : memref<12x32xf32, #tpu.memory_space<vmem>>, vector<1x32xf32>
    tpu.vector_store %arg17[%c5, %c0_42], %50 {strides = array<i32>} : memref<12x32xf32, #tpu.memory_space<vmem>>, vector<1x32xf32>,
    %c0_43 = arith.constant 0 : index
    %c2_44 = arith.constant 2 : index
    %52 = memref.load %arg1[%c0_43, %c2_44] : memref<2x6xi32, #tpu.memory_space<smem>>
    %53 = arith.index_cast %52 : i32 to index
    %c0_45 = arith.constant 0 : index
    %54 = vector.load %arg8[%53, %c0_45] : memref<40x32xf32, #tpu.memory_space<vmem>>, vector<1x32xf32>
    %c6 = arith.constant 6 : index
    %c0_46 = arith.constant 0 : index
    %55 = vector.load %arg17[%c6, %c0_46] : memref<12x32xf32, #tpu.memory_space<vmem>>, vector<1x32xf32>
    tpu.vector_store %arg17[%c6, %c0_46], %54 {strides = array<i32>} : memref<12x32xf32, #tpu.memory_space<vmem>>, vector<1x32xf32>,
    %c1_47 = arith.constant 1 : index
    %c2_48 = arith.constant 2 : index
    %56 = memref.load %arg1[%c1_47, %c2_48] : memref<2x6xi32, #tpu.memory_space<smem>>
    %57 = arith.index_cast %56 : i32 to index
    %c0_49 = arith.constant 0 : index
    %58 = vector.load %arg8[%57, %c0_49] : memref<40x32xf32, #tpu.memory_space<vmem>>, vector<1x32xf32>
    %c7 = arith.constant 7 : index
    %c0_50 = arith.constant 0 : index
    %59 = vector.load %arg17[%c7, %c0_50] : memref<12x32xf32, #tpu.memory_space<vmem>>, vector<1x32xf32>
    tpu.vector_store %arg17[%c7, %c0_50], %58 {strides = array<i32>} : memref<12x32xf32, #tpu.memory_space<vmem>>, vector<1x32xf32>,
    %c0_51 = arith.constant 0 : index
    %c3_52 = arith.constant 3 : index
    %60 = memref.load %arg1[%c0_51, %c3_52] : memref<2x6xi32, #tpu.memory_space<smem>>
    %61 = arith.index_cast %60 : i32 to index
    %c0_53 = arith.constant 0 : index
    %62 = vector.load %arg8[%61, %c0_53] : memref<40x32xf32, #tpu.memory_space<vmem>>, vector<1x32xf32>
    %c8 = arith.constant 8 : index
    %c0_54 = arith.constant 0 : index
    %63 = vector.load %arg17[%c8, %c0_54] : memref<12x32xf32, #tpu.memory_space<vmem>>, vector<1x32xf32>
    tpu.vector_store %arg17[%c8, %c0_54], %62 {strides = array<i32>} : memref<12x32xf32, #tpu.memory_space<vmem>>, vector<1x32xf32>,
    %c1_55 = arith.constant 1 : index
    %c3_56 = arith.constant 3 : index
    %64 = memref.load %arg1[%c1_55, %c3_56] : memref<2x6xi32, #tpu.memory_space<smem>>
    %65 = arith.index_cast %64 : i32 to index
    %c0_57 = arith.constant 0 : index
    %66 = vector.load %arg8[%65, %c0_57] : memref<40x32xf32, #tpu.memory_space<vmem>>, vector<1x32xf32>
    %c9 = arith.constant 9 : index
    %c0_58 = arith.constant 0 : index
    %67 = vector.load %arg17[%c9, %c0_58] : memref<12x32xf32, #tpu.memory_space<vmem>>, vector<1x32xf32>
    tpu.vector_store %arg17[%c9, %c0_58], %66 {strides = array<i32>} : memref<12x32xf32, #tpu.memory_space<vmem>>, vector<1x32xf32>,
    %c0_59 = arith.constant 0 : index
    %c4_60 = arith.constant 4 : index
    %68 = memref.load %arg1[%c0_59, %c4_60] : memref<2x6xi32, #tpu.memory_space<smem>>
    %69 = arith.index_cast %68 : i32 to index
    %c0_61 = arith.constant 0 : index
    %70 = vector.load %arg8[%69, %c0_61] : memref<40x32xf32, #tpu.memory_space<vmem>>, vector<1x32xf32>
    %c10 = arith.constant 10 : index
    %c0_62 = arith.constant 0 : index
    %71 = vector.load %arg17[%c10, %c0_62] : memref<12x32xf32, #tpu.memory_space<vmem>>, vector<1x32xf32>
    tpu.vector_store %arg17[%c10, %c0_62], %70 {strides = array<i32>} : memref<12x32xf32, #tpu.memory_space<vmem>>, vector<1x32xf32>,
    %c1_63 = arith.constant 1 : index
    %c4_64 = arith.constant 4 : index
    %72 = memref.load %arg1[%c1_63, %c4_64] : memref<2x6xi32, #tpu.memory_space<smem>>
    %73 = arith.index_cast %72 : i32 to index
    %c0_65 = arith.constant 0 : index
    %74 = vector.load %arg8[%73, %c0_65] : memref<40x32xf32, #tpu.memory_space<vmem>>, vector<1x32xf32>
    %c11 = arith.constant 11 : index
    %c0_66 = arith.constant 0 : index
    %75 = vector.load %arg17[%c11, %c0_66] : memref<12x32xf32, #tpu.memory_space<vmem>>, vector<1x32xf32>
    tpu.vector_store %arg17[%c11, %c0_66], %74 {strides = array<i32>} : memref<12x32xf32, #tpu.memory_space<vmem>>, vector<1x32xf32>,
    %c0_67 = arith.constant 0 : index
    %c0_68 = arith.constant 0 : index
    %76 = vector.load %arg17[%c0_67, %c0_68] : memref<12x32xf32, #tpu.memory_space<vmem>>, vector<12x32xf32>
    %77 = arith.truncf %76 : vector<12x32xf32> to vector<12x32xbf16>
    %c0_69 = arith.constant 0 : index
    %c0_70 = arith.constant 0 : index
    %78 = vector.load %arg9[%c0_69, %c0_70] : memref<32x128xbf16, #tpu.memory_space<vmem>>, vector<32x128xbf16>
    %cst_71 = arith.constant dense<0.000000e+00> : vector<12x128xf32>
    %79 = tpu.matmul %77, %78, %cst_71 {dimension_numbers = #tpu.dot_dimension_numbers<[1], [0], [0], [1], [0, 0, 1, 1], [], []>} : vector<12x32xbf16>, vector<32x128xbf16>, vector<12x128xf32> -> vector<12x128xf32>
    %c0_72 = arith.constant 0 : index
    %c0_73 = arith.constant 0 : index
    %80 = vector.load %arg11[%c0_72, %c0_73] : memref<1x128xf32, #tpu.memory_space<vmem>>, vector<1x128xf32>
    %81 = vector.broadcast %80 : vector<1x128xf32> to vector<12x128xf32>
    %82 = arith.addf %79, %81 : vector<12x128xf32>
    %c0_74 = arith.constant 0 : index
    %c0_75 = arith.constant 0 : index
    %83 = vector.load %arg16[%c0_74, %c0_75] : memref<12x128xf32, #tpu.memory_space<vmem>>, vector<12x128xf32>
    tpu.vector_store %arg16[%c0_74, %c0_75], %82 {strides = array<i32>} : memref<12x128xf32, #tpu.memory_space<vmem>>, vector<12x128xf32>,
    %c0_76 = arith.constant 0 : index
    %c0_77 = arith.constant 0 : index
    %84 = vector.load %arg6[%c0_76, %c0_77] : memref<32x128xbf16, #tpu.memory_space<vmem>>, vector<32x128xbf16>
    %cst_78 = arith.constant 0.000000e+00 : f32
    %85 = vector.broadcast %cst_78 : f32 to vector<2x32xf32>
    %cst_79 = arith.constant 0.000000e+00 : f32
    %86 = vector.broadcast %cst_79 : f32 to vector<2x32xf32>
    %c0_80 = arith.constant 0 : index
    %c0_81 = arith.constant 0 : index
    %87 = vector.load %arg15[%c0_80, %c0_81] : memref<20x128xf32, #tpu.memory_space<vmem>>, vector<2x128xf32>
    %88 = arith.truncf %85 : vector<2x32xf32> to vector<2x32xbf16>
    %cst_82 = arith.constant dense<0.000000e+00> : vector<2x128xf32>
    %89 = tpu.matmul %88, %84, %cst_82 {dimension_numbers = #tpu.dot_dimension_numbers<[1], [0], [0], [1], [0, 0, 1, 1], [], []>} : vector<2x32xbf16>, vector<32x128xbf16>, vector<2x128xf32> -> vector<2x128xf32>
    %90 = arith.addf %87, %89 : vector<2x128xf32>
    %cst_83 = arith.constant 0.000000e+00 : f32
    %91 = vector.broadcast %cst_83 : f32 to vector<2x128xf32>
    %92 = arith.subf %91, %90 : vector<2x128xf32>
    %93 = math.exp %92 : vector<2x128xf32>
    %cst_84 = arith.constant 1.000000e+00 : f32
    %94 = vector.broadcast %cst_84 : f32 to vector<2x128xf32>
    %95 = arith.addf %94, %93 : vector<2x128xf32>
    %96 = tpu.reciprocal %95 {approx = true} : vector<2x128xf32> -> vector<2x128xf32>
    %97 = math.tanh %90 : vector<2x128xf32>
    %98 = vector.extract_strided_slice %96 {offsets = [0, 0], sizes = [2, 32], strides = [1, 1]} : vector<2x128xf32> to vector<2x32xf32>
    %99 = vector.extract_strided_slice %96 {offsets = [0, 32], sizes = [2, 32], strides = [1, 1]} : vector<2x128xf32> to vector<2x32xf32>
    %100 = vector.extract_strided_slice %96 {offsets = [0, 64], sizes = [2, 32], strides = [1, 1]} : vector<2x128xf32> to vector<2x32xf32>
    %101 = vector.extract_strided_slice %97 {offsets = [0, 96], sizes = [2, 32], strides = [1, 1]} : vector<2x128xf32> to vector<2x32xf32>
    %102 = arith.mulf %99, %86 : vector<2x32xf32>
    %103 = arith.mulf %98, %101 : vector<2x32xf32>
    %104 = arith.addf %102, %103 : vector<2x32xf32>
    %105 = math.tanh %104 : vector<2x32xf32>
    %106 = arith.mulf %100, %105 : vector<2x32xf32>
    %c2_85 = arith.constant 2 : index
    %c0_86 = arith.constant 0 : index
    %107 = vector.load %arg15[%c2_85, %c0_86] : memref<20x128xf32, #tpu.memory_space<vmem>>, vector<2x128xf32>
    %108 = arith.truncf %106 : vector<2x32xf32> to vector<2x32xbf16>
    %cst_87 = arith.constant dense<0.000000e+00> : vector<2x128xf32>
    %109 = tpu.matmul %108, %84, %cst_87 {dimension_numbers = #tpu.dot_dimension_numbers<[1], [0], [0], [1], [0, 0, 1, 1], [], []>} : vector<2x32xbf16>, vector<32x128xbf16>, vector<2x128xf32> -> vector<2x128xf32>
    %110 = arith.addf %107, %109 : vector<2x128xf32>
    %cst_88 = arith.constant 0.000000e+00 : f32
    %111 = vector.broadcast %cst_88 : f32 to vector<2x128xf32>
    %112 = arith.subf %111, %110 : vector<2x128xf32>
    %113 = math.exp %112 : vector<2x128xf32>
    %cst_89 = arith.constant 1.000000e+00 : f32
    %114 = vector.broadcast %cst_89 : f32 to vector<2x128xf32>
    %115 = arith.addf %114, %113 : vector<2x128xf32>
    %116 = tpu.reciprocal %115 {approx = true} : vector<2x128xf32> -> vector<2x128xf32>
    %117 = math.tanh %110 : vector<2x128xf32>
    %118 = vector.extract_strided_slice %116 {offsets = [0, 0], sizes = [2, 32], strides = [1, 1]} : vector<2x128xf32> to vector<2x32xf32>
    %119 = vector.extract_strided_slice %116 {offsets = [0, 32], sizes = [2, 32], strides = [1, 1]} : vector<2x128xf32> to vector<2x32xf32>
    %120 = vector.extract_strided_slice %116 {offsets = [0, 64], sizes = [2, 32], strides = [1, 1]} : vector<2x128xf32> to vector<2x32xf32>
    %121 = vector.extract_strided_slice %117 {offsets = [0, 96], sizes = [2, 32], strides = [1, 1]} : vector<2x128xf32> to vector<2x32xf32>
    %122 = arith.mulf %119, %104 : vector<2x32xf32>
    %123 = arith.mulf %118, %121 : vector<2x32xf32>
    %124 = arith.addf %122, %123 : vector<2x32xf32>
    %125 = math.tanh %124 : vector<2x32xf32>
    %126 = arith.mulf %120, %125 : vector<2x32xf32>
    %c4_90 = arith.constant 4 : index
    %c0_91 = arith.constant 0 : index
    %127 = vector.load %arg15[%c4_90, %c0_91] : memref<20x128xf32, #tpu.memory_space<vmem>>, vector<2x128xf32>
    %128 = arith.truncf %126 : vector<2x32xf32> to vector<2x32xbf16>
    %cst_92 = arith.constant dense<0.000000e+00> : vector<2x128xf32>
    %129 = tpu.matmul %128, %84, %cst_92 {dimension_numbers = #tpu.dot_dimension_numbers<[1], [0], [0], [1], [0, 0, 1, 1], [], []>} : vector<2x32xbf16>, vector<32x128xbf16>, vector<2x128xf32> -> vector<2x128xf32>
    %130 = arith.addf %127, %129 : vector<2x128xf32>
    %cst_93 = arith.constant 0.000000e+00 : f32
    %131 = vector.broadcast %cst_93 : f32 to vector<2x128xf32>
    %132 = arith.subf %131, %130 : vector<2x128xf32>
    %133 = math.exp %132 : vector<2x128xf32>
    %cst_94 = arith.constant 1.000000e+00 : f32
    %134 = vector.broadcast %cst_94 : f32 to vector<2x128xf32>
    %135 = arith.addf %134, %133 : vector<2x128xf32>
    %136 = tpu.reciprocal %135 {approx = true} : vector<2x128xf32> -> vector<2x128xf32>
    %137 = math.tanh %130 : vector<2x128xf32>
    %138 = vector.extract_strided_slice %136 {offsets = [0, 0], sizes = [2, 32], strides = [1, 1]} : vector<2x128xf32> to vector<2x32xf32>
    %139 = vector.extract_strided_slice %136 {offsets = [0, 32], sizes = [2, 32], strides = [1, 1]} : vector<2x128xf32> to vector<2x32xf32>
    %140 = vector.extract_strided_slice %136 {offsets = [0, 64], sizes = [2, 32], strides = [1, 1]} : vector<2x128xf32> to vector<2x32xf32>
    %141 = vector.extract_strided_slice %137 {offsets = [0, 96], sizes = [2, 32], strides = [1, 1]} : vector<2x128xf32> to vector<2x32xf32>
    %142 = arith.mulf %139, %124 : vector<2x32xf32>
    %143 = arith.mulf %138, %141 : vector<2x32xf32>
    %144 = arith.addf %142, %143 : vector<2x32xf32>
    %145 = math.tanh %144 : vector<2x32xf32>
    %146 = arith.mulf %140, %145 : vector<2x32xf32>
    %c6_95 = arith.constant 6 : index
    %c0_96 = arith.constant 0 : index
    %147 = vector.load %arg15[%c6_95, %c0_96] : memref<20x128xf32, #tpu.memory_space<vmem>>, vector<2x128xf32>
    %148 = arith.truncf %146 : vector<2x32xf32> to vector<2x32xbf16>
    %cst_97 = arith.constant dense<0.000000e+00> : vector<2x128xf32>
    %149 = tpu.matmul %148, %84, %cst_97 {dimension_numbers = #tpu.dot_dimension_numbers<[1], [0], [0], [1], [0, 0, 1, 1], [], []>} : vector<2x32xbf16>, vector<32x128xbf16>, vector<2x128xf32> -> vector<2x128xf32>
    %150 = arith.addf %147, %149 : vector<2x128xf32>
    %cst_98 = arith.constant 0.000000e+00 : f32
    %151 = vector.broadcast %cst_98 : f32 to vector<2x128xf32>
    %152 = arith.subf %151, %150 : vector<2x128xf32>
    %153 = math.exp %152 : vector<2x128xf32>
    %cst_99 = arith.constant 1.000000e+00 : f32
    %154 = vector.broadcast %cst_99 : f32 to vector<2x128xf32>
    %155 = arith.addf %154, %153 : vector<2x128xf32>
    %156 = tpu.reciprocal %155 {approx = true} : vector<2x128xf32> -> vector<2x128xf32>
    %157 = math.tanh %150 : vector<2x128xf32>
    %158 = vector.extract_strided_slice %156 {offsets = [0, 0], sizes = [2, 32], strides = [1, 1]} : vector<2x128xf32> to vector<2x32xf32>
    %159 = vector.extract_strided_slice %156 {offsets = [0, 32], sizes = [2, 32], strides = [1, 1]} : vector<2x128xf32> to vector<2x32xf32>
    %160 = vector.extract_strided_slice %156 {offsets = [0, 64], sizes = [2, 32], strides = [1, 1]} : vector<2x128xf32> to vector<2x32xf32>
    %161 = vector.extract_strided_slice %157 {offsets = [0, 96], sizes = [2, 32], strides = [1, 1]} : vector<2x128xf32> to vector<2x32xf32>
    %162 = arith.mulf %159, %144 : vector<2x32xf32>
    %163 = arith.mulf %158, %161 : vector<2x32xf32>
    %164 = arith.addf %162, %163 : vector<2x32xf32>
    %165 = math.tanh %164 : vector<2x32xf32>
    %166 = arith.mulf %160, %165 : vector<2x32xf32>
    %c8_100 = arith.constant 8 : index
    %c0_101 = arith.constant 0 : index
    %167 = vector.load %arg15[%c8_100, %c0_101] : memref<20x128xf32, #tpu.memory_space<vmem>>, vector<2x128xf32>
    %168 = arith.truncf %166 : vector<2x32xf32> to vector<2x32xbf16>
    %cst_102 = arith.constant dense<0.000000e+00> : vector<2x128xf32>
    %169 = tpu.matmul %168, %84, %cst_102 {dimension_numbers = #tpu.dot_dimension_numbers<[1], [0], [0], [1], [0, 0, 1, 1], [], []>} : vector<2x32xbf16>, vector<32x128xbf16>, vector<2x128xf32> -> vector<2x128xf32>
    %170 = arith.addf %167, %169 : vector<2x128xf32>
    %cst_103 = arith.constant 0.000000e+00 : f32
    %171 = vector.broadcast %cst_103 : f32 to vector<2x128xf32>
    %172 = arith.subf %171, %170 : vector<2x128xf32>
    %173 = math.exp %172 : vector<2x128xf32>
    %cst_104 = arith.constant 1.000000e+00 : f32
    %174 = vector.broadcast %cst_104 : f32 to vector<2x128xf32>
    %175 = arith.addf %174, %173 : vector<2x128xf32>
    %176 = tpu.reciprocal %175 {approx = true} : vector<2x128xf32> -> vector<2x128xf32>
    %177 = math.tanh %170 : vector<2x128xf32>
    %178 = vector.extract_strided_slice %176 {offsets = [0, 0], sizes = [2, 32], strides = [1, 1]} : vector<2x128xf32> to vector<2x32xf32>
    %179 = vector.extract_strided_slice %176 {offsets = [0, 32], sizes = [2, 32], strides = [1, 1]} : vector<2x128xf32> to vector<2x32xf32>
    %180 = vector.extract_strided_slice %176 {offsets = [0, 64], sizes = [2, 32], strides = [1, 1]} : vector<2x128xf32> to vector<2x32xf32>
    %181 = vector.extract_strided_slice %177 {offsets = [0, 96], sizes = [2, 32], strides = [1, 1]} : vector<2x128xf32> to vector<2x32xf32>
    %182 = arith.mulf %179, %164 : vector<2x32xf32>
    %183 = arith.mulf %178, %181 : vector<2x32xf32>
    %184 = arith.addf %182, %183 : vector<2x32xf32>
    %185 = math.tanh %184 : vector<2x32xf32>
    %186 = arith.mulf %180, %185 : vector<2x32xf32>
    %c10_105 = arith.constant 10 : index
    %c0_106 = arith.constant 0 : index
    %187 = vector.load %arg15[%c10_105, %c0_106] : memref<20x128xf32, #tpu.memory_space<vmem>>, vector<2x128xf32>
    %188 = arith.truncf %186 : vector<2x32xf32> to vector<2x32xbf16>
    %cst_107 = arith.constant dense<0.000000e+00> : vector<2x128xf32>
    %189 = tpu.matmul %188, %84, %cst_107 {dimension_numbers = #tpu.dot_dimension_numbers<[1], [0], [0], [1], [0, 0, 1, 1], [], []>} : vector<2x32xbf16>, vector<32x128xbf16>, vector<2x128xf32> -> vector<2x128xf32>
    %190 = arith.addf %187, %189 : vector<2x128xf32>
    %cst_108 = arith.constant 0.000000e+00 : f32
    %191 = vector.broadcast %cst_108 : f32 to vector<2x128xf32>
    %192 = arith.subf %191, %190 : vector<2x128xf32>
    %193 = math.exp %192 : vector<2x128xf32>
    %cst_109 = arith.constant 1.000000e+00 : f32
    %194 = vector.broadcast %cst_109 : f32 to vector<2x128xf32>
    %195 = arith.addf %194, %193 : vector<2x128xf32>
    %196 = tpu.reciprocal %195 {approx = true} : vector<2x128xf32> -> vector<2x128xf32>
    %197 = math.tanh %190 : vector<2x128xf32>
    %198 = vector.extract_strided_slice %196 {offsets = [0, 0], sizes = [2, 32], strides = [1, 1]} : vector<2x128xf32> to vector<2x32xf32>
    %199 = vector.extract_strided_slice %196 {offsets = [0, 32], sizes = [2, 32], strides = [1, 1]} : vector<2x128xf32> to vector<2x32xf32>
    %200 = vector.extract_strided_slice %196 {offsets = [0, 64], sizes = [2, 32], strides = [1, 1]} : vector<2x128xf32> to vector<2x32xf32>
    %201 = vector.extract_strided_slice %197 {offsets = [0, 96], sizes = [2, 32], strides = [1, 1]} : vector<2x128xf32> to vector<2x32xf32>
    %202 = arith.mulf %199, %184 : vector<2x32xf32>
    %203 = arith.mulf %198, %201 : vector<2x32xf32>
    %204 = arith.addf %202, %203 : vector<2x32xf32>
    %205 = math.tanh %204 : vector<2x32xf32>
    %206 = arith.mulf %200, %205 : vector<2x32xf32>
    %c12 = arith.constant 12 : index
    %c0_110 = arith.constant 0 : index
    %207 = vector.load %arg15[%c12, %c0_110] : memref<20x128xf32, #tpu.memory_space<vmem>>, vector<2x128xf32>
    %208 = arith.truncf %206 : vector<2x32xf32> to vector<2x32xbf16>
    %cst_111 = arith.constant dense<0.000000e+00> : vector<2x128xf32>
    %209 = tpu.matmul %208, %84, %cst_111 {dimension_numbers = #tpu.dot_dimension_numbers<[1], [0], [0], [1], [0, 0, 1, 1], [], []>} : vector<2x32xbf16>, vector<32x128xbf16>, vector<2x128xf32> -> vector<2x128xf32>
    %210 = arith.addf %207, %209 : vector<2x128xf32>
    %cst_112 = arith.constant 0.000000e+00 : f32
    %211 = vector.broadcast %cst_112 : f32 to vector<2x128xf32>
    %212 = arith.subf %211, %210 : vector<2x128xf32>
    %213 = math.exp %212 : vector<2x128xf32>
    %cst_113 = arith.constant 1.000000e+00 : f32
    %214 = vector.broadcast %cst_113 : f32 to vector<2x128xf32>
    %215 = arith.addf %214, %213 : vector<2x128xf32>
    %216 = tpu.reciprocal %215 {approx = true} : vector<2x128xf32> -> vector<2x128xf32>
    %217 = math.tanh %210 : vector<2x128xf32>
    %218 = vector.extract_strided_slice %216 {offsets = [0, 0], sizes = [2, 32], strides = [1, 1]} : vector<2x128xf32> to vector<2x32xf32>
    %219 = vector.extract_strided_slice %216 {offsets = [0, 32], sizes = [2, 32], strides = [1, 1]} : vector<2x128xf32> to vector<2x32xf32>
    %220 = vector.extract_strided_slice %216 {offsets = [0, 64], sizes = [2, 32], strides = [1, 1]} : vector<2x128xf32> to vector<2x32xf32>
    %221 = vector.extract_strided_slice %217 {offsets = [0, 96], sizes = [2, 32], strides = [1, 1]} : vector<2x128xf32> to vector<2x32xf32>
    %222 = arith.mulf %219, %204 : vector<2x32xf32>
    %223 = arith.mulf %218, %221 : vector<2x32xf32>
    %224 = arith.addf %222, %223 : vector<2x32xf32>
    %225 = math.tanh %224 : vector<2x32xf32>
    %226 = arith.mulf %220, %225 : vector<2x32xf32>
    %c14 = arith.constant 14 : index
    %c0_114 = arith.constant 0 : index
    %227 = vector.load %arg15[%c14, %c0_114] : memref<20x128xf32, #tpu.memory_space<vmem>>, vector<2x128xf32>
    %228 = arith.truncf %226 : vector<2x32xf32> to vector<2x32xbf16>
    %cst_115 = arith.constant dense<0.000000e+00> : vector<2x128xf32>
    %229 = tpu.matmul %228, %84, %cst_115 {dimension_numbers = #tpu.dot_dimension_numbers<[1], [0], [0], [1], [0, 0, 1, 1], [], []>} : vector<2x32xbf16>, vector<32x128xbf16>, vector<2x128xf32> -> vector<2x128xf32>
    %230 = arith.addf %227, %229 : vector<2x128xf32>
    %cst_116 = arith.constant 0.000000e+00 : f32
    %231 = vector.broadcast %cst_116 : f32 to vector<2x128xf32>
    %232 = arith.subf %231, %230 : vector<2x128xf32>
    %233 = math.exp %232 : vector<2x128xf32>
    %cst_117 = arith.constant 1.000000e+00 : f32
    %234 = vector.broadcast %cst_117 : f32 to vector<2x128xf32>
    %235 = arith.addf %234, %233 : vector<2x128xf32>
    %236 = tpu.reciprocal %235 {approx = true} : vector<2x128xf32> -> vector<2x128xf32>
    %237 = math.tanh %230 : vector<2x128xf32>
    %238 = vector.extract_strided_slice %236 {offsets = [0, 0], sizes = [2, 32], strides = [1, 1]} : vector<2x128xf32> to vector<2x32xf32>
    %239 = vector.extract_strided_slice %236 {offsets = [0, 32], sizes = [2, 32], strides = [1, 1]} : vector<2x128xf32> to vector<2x32xf32>
    %240 = vector.extract_strided_slice %236 {offsets = [0, 64], sizes = [2, 32], strides = [1, 1]} : vector<2x128xf32> to vector<2x32xf32>
    %241 = vector.extract_strided_slice %237 {offsets = [0, 96], sizes = [2, 32], strides = [1, 1]} : vector<2x128xf32> to vector<2x32xf32>
    %242 = arith.mulf %239, %224 : vector<2x32xf32>
    %243 = arith.mulf %238, %241 : vector<2x32xf32>
    %244 = arith.addf %242, %243 : vector<2x32xf32>
    %245 = math.tanh %244 : vector<2x32xf32>
    %246 = arith.mulf %240, %245 : vector<2x32xf32>
    %c16 = arith.constant 16 : index
    %c0_118 = arith.constant 0 : index
    %247 = vector.load %arg15[%c16, %c0_118] : memref<20x128xf32, #tpu.memory_space<vmem>>, vector<2x128xf32>
    %248 = arith.truncf %246 : vector<2x32xf32> to vector<2x32xbf16>
    %cst_119 = arith.constant dense<0.000000e+00> : vector<2x128xf32>
    %249 = tpu.matmul %248, %84, %cst_119 {dimension_numbers = #tpu.dot_dimension_numbers<[1], [0], [0], [1], [0, 0, 1, 1], [], []>} : vector<2x32xbf16>, vector<32x128xbf16>, vector<2x128xf32> -> vector<2x128xf32>
    %250 = arith.addf %247, %249 : vector<2x128xf32>
    %cst_120 = arith.constant 0.000000e+00 : f32
    %251 = vector.broadcast %cst_120 : f32 to vector<2x128xf32>
    %252 = arith.subf %251, %250 : vector<2x128xf32>
    %253 = math.exp %252 : vector<2x128xf32>
    %cst_121 = arith.constant 1.000000e+00 : f32
    %254 = vector.broadcast %cst_121 : f32 to vector<2x128xf32>
    %255 = arith.addf %254, %253 : vector<2x128xf32>
    %256 = tpu.reciprocal %255 {approx = true} : vector<2x128xf32> -> vector<2x128xf32>
    %257 = math.tanh %250 : vector<2x128xf32>
    %258 = vector.extract_strided_slice %256 {offsets = [0, 0], sizes = [2, 32], strides = [1, 1]} : vector<2x128xf32> to vector<2x32xf32>
    %259 = vector.extract_strided_slice %256 {offsets = [0, 32], sizes = [2, 32], strides = [1, 1]} : vector<2x128xf32> to vector<2x32xf32>
    %260 = vector.extract_strided_slice %256 {offsets = [0, 64], sizes = [2, 32], strides = [1, 1]} : vector<2x128xf32> to vector<2x32xf32>
    %261 = vector.extract_strided_slice %257 {offsets = [0, 96], sizes = [2, 32], strides = [1, 1]} : vector<2x128xf32> to vector<2x32xf32>
    %262 = arith.mulf %259, %244 : vector<2x32xf32>
    %263 = arith.mulf %258, %261 : vector<2x32xf32>
    %264 = arith.addf %262, %263 : vector<2x32xf32>
    %265 = math.tanh %264 : vector<2x32xf32>
    %266 = arith.mulf %260, %265 : vector<2x32xf32>
    %c18 = arith.constant 18 : index
    %c0_122 = arith.constant 0 : index
    %267 = vector.load %arg15[%c18, %c0_122] : memref<20x128xf32, #tpu.memory_space<vmem>>, vector<2x128xf32>
    %268 = arith.truncf %266 : vector<2x32xf32> to vector<2x32xbf16>
    %cst_123 = arith.constant dense<0.000000e+00> : vector<2x128xf32>
    %269 = tpu.matmul %268, %84, %cst_123 {dimension_numbers = #tpu.dot_dimension_numbers<[1], [0], [0], [1], [0, 0, 1, 1], [], []>} : vector<2x32xbf16>, vector<32x128xbf16>, vector<2x128xf32> -> vector<2x128xf32>
    %270 = arith.addf %267, %269 : vector<2x128xf32>
    %cst_124 = arith.constant 0.000000e+00 : f32
    %271 = vector.broadcast %cst_124 : f32 to vector<2x128xf32>
    %272 = arith.subf %271, %270 : vector<2x128xf32>
    %273 = math.exp %272 : vector<2x128xf32>
    %cst_125 = arith.constant 1.000000e+00 : f32
    %274 = vector.broadcast %cst_125 : f32 to vector<2x128xf32>
    %275 = arith.addf %274, %273 : vector<2x128xf32>
    %276 = tpu.reciprocal %275 {approx = true} : vector<2x128xf32> -> vector<2x128xf32>
    %277 = math.tanh %270 : vector<2x128xf32>
    %278 = vector.extract_strided_slice %276 {offsets = [0, 0], sizes = [2, 32], strides = [1, 1]} : vector<2x128xf32> to vector<2x32xf32>
    %279 = vector.extract_strided_slice %276 {offsets = [0, 32], sizes = [2, 32], strides = [1, 1]} : vector<2x128xf32> to vector<2x32xf32>
    %280 = vector.extract_strided_slice %276 {offsets = [0, 64], sizes = [2, 32], strides = [1, 1]} : vector<2x128xf32> to vector<2x32xf32>
    %281 = vector.extract_strided_slice %277 {offsets = [0, 96], sizes = [2, 32], strides = [1, 1]} : vector<2x128xf32> to vector<2x32xf32>
    %282 = arith.mulf %279, %264 : vector<2x32xf32>
    %283 = arith.mulf %278, %281 : vector<2x32xf32>
    %284 = arith.addf %282, %283 : vector<2x32xf32>
    %285 = math.tanh %284 : vector<2x32xf32>
    %286 = arith.mulf %280, %285 : vector<2x32xf32>
    %c0_126 = arith.constant 0 : index
    %c0_127 = arith.constant 0 : index
    %287 = vector.load %arg10[%c0_126, %c0_127] : memref<32x128xbf16, #tpu.memory_space<vmem>>, vector<32x128xbf16>
    %c0_128 = arith.constant 0 : index
    %c0_129 = arith.constant 0 : index
    %288 = vector.load %arg12[%c0_128, %c0_129] : memref<32x128xbf16, #tpu.memory_space<vmem>>, vector<32x128xbf16>
    %c0_130 = arith.constant 0 : index
    %c0_131 = arith.constant 0 : index
    %289 = vector.load %arg13[%c0_130, %c0_131] : memref<1x128xf32, #tpu.memory_space<vmem>>, vector<1x128xf32>
    %c0_132 = arith.constant 0 : index
    %c0_133 = arith.constant 0 : index
    %290 = vector.load %arg16[%c0_132, %c0_133] : memref<12x128xf32, #tpu.memory_space<vmem>>, vector<2x128xf32>
    %291 = arith.truncf %286 : vector<2x32xf32> to vector<2x32xbf16>
    %cst_134 = arith.constant dense<0.000000e+00> : vector<2x128xf32>
    %292 = tpu.matmul %291, %287, %cst_134 {dimension_numbers = #tpu.dot_dimension_numbers<[1], [0], [0], [1], [0, 0, 1, 1], [], []>} : vector<2x32xbf16>, vector<32x128xbf16>, vector<2x128xf32> -> vector<2x128xf32>
    %293 = arith.addf %290, %292 : vector<2x128xf32>
    %cst_135 = arith.constant 0.000000e+00 : f32
    %294 = vector.broadcast %cst_135 : f32 to vector<2x128xf32>
    %295 = arith.subf %294, %293 : vector<2x128xf32>
    %296 = math.exp %295 : vector<2x128xf32>
    %cst_136 = arith.constant 1.000000e+00 : f32
    %297 = vector.broadcast %cst_136 : f32 to vector<2x128xf32>
    %298 = arith.addf %297, %296 : vector<2x128xf32>
    %299 = tpu.reciprocal %298 {approx = true} : vector<2x128xf32> -> vector<2x128xf32>
    %300 = math.tanh %293 : vector<2x128xf32>
    %301 = vector.extract_strided_slice %299 {offsets = [0, 0], sizes = [2, 32], strides = [1, 1]} : vector<2x128xf32> to vector<2x32xf32>
    %302 = vector.extract_strided_slice %299 {offsets = [0, 32], sizes = [2, 32], strides = [1, 1]} : vector<2x128xf32> to vector<2x32xf32>
    %303 = vector.extract_strided_slice %299 {offsets = [0, 64], sizes = [2, 32], strides = [1, 1]} : vector<2x128xf32> to vector<2x32xf32>
    %304 = vector.extract_strided_slice %300 {offsets = [0, 96], sizes = [2, 32], strides = [1, 1]} : vector<2x128xf32> to vector<2x32xf32>
    %305 = arith.mulf %302, %284 : vector<2x32xf32>
    %306 = arith.mulf %301, %304 : vector<2x32xf32>
    %307 = arith.addf %305, %306 : vector<2x32xf32>
    %308 = math.tanh %307 : vector<2x32xf32>
    %309 = arith.mulf %303, %308 : vector<2x32xf32>
    %310 = arith.truncf %309 : vector<2x32xf32> to vector<2x32xbf16>
    %cst_137 = arith.constant dense<0.000000e+00> : vector<2x128xf32>
    %311 = tpu.matmul %310, %288, %cst_137 {dimension_numbers = #tpu.dot_dimension_numbers<[1], [0], [0], [1], [0, 0, 1, 1], [], []>} : vector<2x32xbf16>, vector<32x128xbf16>, vector<2x128xf32> -> vector<2x128xf32>
    %312 = vector.broadcast %289 : vector<1x128xf32> to vector<2x128xf32>
    %313 = arith.addf %311, %312 : vector<2x128xf32>
    %c0_138 = arith.constant 0 : index
    %c0_139 = arith.constant 0 : index
    %314 = vector.load %arg14[%c0_138, %c0_139] : memref<12x128xf32, #tpu.memory_space<vmem>>, vector<2x128xf32>
    tpu.vector_store %arg14[%c0_138, %c0_139], %313 {strides = array<i32>} : memref<12x128xf32, #tpu.memory_space<vmem>>, vector<2x128xf32>,
    %c2_140 = arith.constant 2 : index
    %c0_141 = arith.constant 0 : index
    %315 = vector.load %arg16[%c2_140, %c0_141] : memref<12x128xf32, #tpu.memory_space<vmem>>, vector<2x128xf32>
    %316 = arith.truncf %309 : vector<2x32xf32> to vector<2x32xbf16>
    %cst_142 = arith.constant dense<0.000000e+00> : vector<2x128xf32>
    %317 = tpu.matmul %316, %287, %cst_142 {dimension_numbers = #tpu.dot_dimension_numbers<[1], [0], [0], [1], [0, 0, 1, 1], [], []>} : vector<2x32xbf16>, vector<32x128xbf16>, vector<2x128xf32> -> vector<2x128xf32>
    %318 = arith.addf %315, %317 : vector<2x128xf32>
    %cst_143 = arith.constant 0.000000e+00 : f32
    %319 = vector.broadcast %cst_143 : f32 to vector<2x128xf32>
    %320 = arith.subf %319, %318 : vector<2x128xf32>
    %321 = math.exp %320 : vector<2x128xf32>
    %cst_144 = arith.constant 1.000000e+00 : f32
    %322 = vector.broadcast %cst_144 : f32 to vector<2x128xf32>
    %323 = arith.addf %322, %321 : vector<2x128xf32>
    %324 = tpu.reciprocal %323 {approx = true} : vector<2x128xf32> -> vector<2x128xf32>
    %325 = math.tanh %318 : vector<2x128xf32>
    %326 = vector.extract_strided_slice %324 {offsets = [0, 0], sizes = [2, 32], strides = [1, 1]} : vector<2x128xf32> to vector<2x32xf32>
    %327 = vector.extract_strided_slice %324 {offsets = [0, 32], sizes = [2, 32], strides = [1, 1]} : vector<2x128xf32> to vector<2x32xf32>
    %328 = vector.extract_strided_slice %324 {offsets = [0, 64], sizes = [2, 32], strides = [1, 1]} : vector<2x128xf32> to vector<2x32xf32>
    %329 = vector.extract_strided_slice %325 {offsets = [0, 96], sizes = [2, 32], strides = [1, 1]} : vector<2x128xf32> to vector<2x32xf32>
    %330 = arith.mulf %327, %307 : vector<2x32xf32>
    %331 = arith.mulf %326, %329 : vector<2x32xf32>
    %332 = arith.addf %330, %331 : vector<2x32xf32>
    %333 = math.tanh %332 : vector<2x32xf32>
    %334 = arith.mulf %328, %333 : vector<2x32xf32>
    %335 = arith.truncf %334 : vector<2x32xf32> to vector<2x32xbf16>
    %cst_145 = arith.constant dense<0.000000e+00> : vector<2x128xf32>
    %336 = tpu.matmul %335, %288, %cst_145 {dimension_numbers = #tpu.dot_dimension_numbers<[1], [0], [0], [1], [0, 0, 1, 1], [], []>} : vector<2x32xbf16>, vector<32x128xbf16>, vector<2x128xf32> -> vector<2x128xf32>
    %337 = vector.broadcast %289 : vector<1x128xf32> to vector<2x128xf32>
    %338 = arith.addf %336, %337 : vector<2x128xf32>
    %c2_146 = arith.constant 2 : index
    %c0_147 = arith.constant 0 : index
    %339 = vector.load %arg14[%c2_146, %c0_147] : memref<12x128xf32, #tpu.memory_space<vmem>>, vector<2x128xf32>
    tpu.vector_store %arg14[%c2_146, %c0_147], %338 {strides = array<i32>} : memref<12x128xf32, #tpu.memory_space<vmem>>, vector<2x128xf32>,
    %c4_148 = arith.constant 4 : index
    %c0_149 = arith.constant 0 : index
    %340 = vector.load %arg16[%c4_148, %c0_149] : memref<12x128xf32, #tpu.memory_space<vmem>>, vector<2x128xf32>
    %341 = arith.truncf %334 : vector<2x32xf32> to vector<2x32xbf16>
    %cst_150 = arith.constant dense<0.000000e+00> : vector<2x128xf32>
    %342 = tpu.matmul %341, %287, %cst_150 {dimension_numbers = #tpu.dot_dimension_numbers<[1], [0], [0], [1], [0, 0, 1, 1], [], []>} : vector<2x32xbf16>, vector<32x128xbf16>, vector<2x128xf32> -> vector<2x128xf32>
    %343 = arith.addf %340, %342 : vector<2x128xf32>
    %cst_151 = arith.constant 0.000000e+00 : f32
    %344 = vector.broadcast %cst_151 : f32 to vector<2x128xf32>
    %345 = arith.subf %344, %343 : vector<2x128xf32>
    %346 = math.exp %345 : vector<2x128xf32>
    %cst_152 = arith.constant 1.000000e+00 : f32
    %347 = vector.broadcast %cst_152 : f32 to vector<2x128xf32>
    %348 = arith.addf %347, %346 : vector<2x128xf32>
    %349 = tpu.reciprocal %348 {approx = true} : vector<2x128xf32> -> vector<2x128xf32>
    %350 = math.tanh %343 : vector<2x128xf32>
    %351 = vector.extract_strided_slice %349 {offsets = [0, 0], sizes = [2, 32], strides = [1, 1]} : vector<2x128xf32> to vector<2x32xf32>
    %352 = vector.extract_strided_slice %349 {offsets = [0, 32], sizes = [2, 32], strides = [1, 1]} : vector<2x128xf32> to vector<2x32xf32>
    %353 = vector.extract_strided_slice %349 {offsets = [0, 64], sizes = [2, 32], strides = [1, 1]} : vector<2x128xf32> to vector<2x32xf32>
    %354 = vector.extract_strided_slice %350 {offsets = [0, 96], sizes = [2, 32], strides = [1, 1]} : vector<2x128xf32> to vector<2x32xf32>
    %355 = arith.mulf %352, %332 : vector<2x32xf32>
    %356 = arith.mulf %351, %354 : vector<2x32xf32>
    %357 = arith.addf %355, %356 : vector<2x32xf32>
    %358 = math.tanh %357 : vector<2x32xf32>
    %359 = arith.mulf %353, %358 : vector<2x32xf32>
    %360 = arith.truncf %359 : vector<2x32xf32> to vector<2x32xbf16>
    %cst_153 = arith.constant dense<0.000000e+00> : vector<2x128xf32>
    %361 = tpu.matmul %360, %288, %cst_153 {dimension_numbers = #tpu.dot_dimension_numbers<[1], [0], [0], [1], [0, 0, 1, 1], [], []>} : vector<2x32xbf16>, vector<32x128xbf16>, vector<2x128xf32> -> vector<2x128xf32>
    %362 = vector.broadcast %289 : vector<1x128xf32> to vector<2x128xf32>
    %363 = arith.addf %361, %362 : vector<2x128xf32>
    %c4_154 = arith.constant 4 : index
    %c0_155 = arith.constant 0 : index
    %364 = vector.load %arg14[%c4_154, %c0_155] : memref<12x128xf32, #tpu.memory_space<vmem>>, vector<2x128xf32>
    tpu.vector_store %arg14[%c4_154, %c0_155], %363 {strides = array<i32>} : memref<12x128xf32, #tpu.memory_space<vmem>>, vector<2x128xf32>,
    %c6_156 = arith.constant 6 : index
    %c0_157 = arith.constant 0 : index
    %365 = vector.load %arg16[%c6_156, %c0_157] : memref<12x128xf32, #tpu.memory_space<vmem>>, vector<2x128xf32>
    %366 = arith.truncf %359 : vector<2x32xf32> to vector<2x32xbf16>
    %cst_158 = arith.constant dense<0.000000e+00> : vector<2x128xf32>
    %367 = tpu.matmul %366, %287, %cst_158 {dimension_numbers = #tpu.dot_dimension_numbers<[1], [0], [0], [1], [0, 0, 1, 1], [], []>} : vector<2x32xbf16>, vector<32x128xbf16>, vector<2x128xf32> -> vector<2x128xf32>
    %368 = arith.addf %365, %367 : vector<2x128xf32>
    %cst_159 = arith.constant 0.000000e+00 : f32
    %369 = vector.broadcast %cst_159 : f32 to vector<2x128xf32>
    %370 = arith.subf %369, %368 : vector<2x128xf32>
    %371 = math.exp %370 : vector<2x128xf32>
    %cst_160 = arith.constant 1.000000e+00 : f32
    %372 = vector.broadcast %cst_160 : f32 to vector<2x128xf32>
    %373 = arith.addf %372, %371 : vector<2x128xf32>
    %374 = tpu.reciprocal %373 {approx = true} : vector<2x128xf32> -> vector<2x128xf32>
    %375 = math.tanh %368 : vector<2x128xf32>
    %376 = vector.extract_strided_slice %374 {offsets = [0, 0], sizes = [2, 32], strides = [1, 1]} : vector<2x128xf32> to vector<2x32xf32>
    %377 = vector.extract_strided_slice %374 {offsets = [0, 32], sizes = [2, 32], strides = [1, 1]} : vector<2x128xf32> to vector<2x32xf32>
    %378 = vector.extract_strided_slice %374 {offsets = [0, 64], sizes = [2, 32], strides = [1, 1]} : vector<2x128xf32> to vector<2x32xf32>
    %379 = vector.extract_strided_slice %375 {offsets = [0, 96], sizes = [2, 32], strides = [1, 1]} : vector<2x128xf32> to vector<2x32xf32>
    %380 = arith.mulf %377, %357 : vector<2x32xf32>
    %381 = arith.mulf %376, %379 : vector<2x32xf32>
    %382 = arith.addf %380, %381 : vector<2x32xf32>
    %383 = math.tanh %382 : vector<2x32xf32>
    %384 = arith.mulf %378, %383 : vector<2x32xf32>
    %385 = arith.truncf %384 : vector<2x32xf32> to vector<2x32xbf16>
    %cst_161 = arith.constant dense<0.000000e+00> : vector<2x128xf32>
    %386 = tpu.matmul %385, %288, %cst_161 {dimension_numbers = #tpu.dot_dimension_numbers<[1], [0], [0], [1], [0, 0, 1, 1], [], []>} : vector<2x32xbf16>, vector<32x128xbf16>, vector<2x128xf32> -> vector<2x128xf32>
    %387 = vector.broadcast %289 : vector<1x128xf32> to vector<2x128xf32>
    %388 = arith.addf %386, %387 : vector<2x128xf32>
    %c6_162 = arith.constant 6 : index
    %c0_163 = arith.constant 0 : index
    %389 = vector.load %arg14[%c6_162, %c0_163] : memref<12x128xf32, #tpu.memory_space<vmem>>, vector<2x128xf32>
    tpu.vector_store %arg14[%c6_162, %c0_163], %388 {strides = array<i32>} : memref<12x128xf32, #tpu.memory_space<vmem>>, vector<2x128xf32>,
    %c8_164 = arith.constant 8 : index
    %c0_165 = arith.constant 0 : index
    %390 = vector.load %arg16[%c8_164, %c0_165] : memref<12x128xf32, #tpu.memory_space<vmem>>, vector<2x128xf32>
    %391 = arith.truncf %384 : vector<2x32xf32> to vector<2x32xbf16>
    %cst_166 = arith.constant dense<0.000000e+00> : vector<2x128xf32>
    %392 = tpu.matmul %391, %287, %cst_166 {dimension_numbers = #tpu.dot_dimension_numbers<[1], [0], [0], [1], [0, 0, 1, 1], [], []>} : vector<2x32xbf16>, vector<32x128xbf16>, vector<2x128xf32> -> vector<2x128xf32>
    %393 = arith.addf %390, %392 : vector<2x128xf32>
    %cst_167 = arith.constant 0.000000e+00 : f32
    %394 = vector.broadcast %cst_167 : f32 to vector<2x128xf32>
    %395 = arith.subf %394, %393 : vector<2x128xf32>
    %396 = math.exp %395 : vector<2x128xf32>
    %cst_168 = arith.constant 1.000000e+00 : f32
    %397 = vector.broadcast %cst_168 : f32 to vector<2x128xf32>
    %398 = arith.addf %397, %396 : vector<2x128xf32>
    %399 = tpu.reciprocal %398 {approx = true} : vector<2x128xf32> -> vector<2x128xf32>
    %400 = math.tanh %393 : vector<2x128xf32>
    %401 = vector.extract_strided_slice %399 {offsets = [0, 0], sizes = [2, 32], strides = [1, 1]} : vector<2x128xf32> to vector<2x32xf32>
    %402 = vector.extract_strided_slice %399 {offsets = [0, 32], sizes = [2, 32], strides = [1, 1]} : vector<2x128xf32> to vector<2x32xf32>
    %403 = vector.extract_strided_slice %399 {offsets = [0, 64], sizes = [2, 32], strides = [1, 1]} : vector<2x128xf32> to vector<2x32xf32>
    %404 = vector.extract_strided_slice %400 {offsets = [0, 96], sizes = [2, 32], strides = [1, 1]} : vector<2x128xf32> to vector<2x32xf32>
    %405 = arith.mulf %402, %382 : vector<2x32xf32>
    %406 = arith.mulf %401, %404 : vector<2x32xf32>
    %407 = arith.addf %405, %406 : vector<2x32xf32>
    %408 = math.tanh %407 : vector<2x32xf32>
    %409 = arith.mulf %403, %408 : vector<2x32xf32>
    %410 = arith.truncf %409 : vector<2x32xf32> to vector<2x32xbf16>
    %cst_169 = arith.constant dense<0.000000e+00> : vector<2x128xf32>
    %411 = tpu.matmul %410, %288, %cst_169 {dimension_numbers = #tpu.dot_dimension_numbers<[1], [0], [0], [1], [0, 0, 1, 1], [], []>} : vector<2x32xbf16>, vector<32x128xbf16>, vector<2x128xf32> -> vector<2x128xf32>
    %412 = vector.broadcast %289 : vector<1x128xf32> to vector<2x128xf32>
    %413 = arith.addf %411, %412 : vector<2x128xf32>
    %c8_170 = arith.constant 8 : index
    %c0_171 = arith.constant 0 : index
    %414 = vector.load %arg14[%c8_170, %c0_171] : memref<12x128xf32, #tpu.memory_space<vmem>>, vector<2x128xf32>
    tpu.vector_store %arg14[%c8_170, %c0_171], %413 {strides = array<i32>} : memref<12x128xf32, #tpu.memory_space<vmem>>, vector<2x128xf32>,
    %c10_172 = arith.constant 10 : index
    %c0_173 = arith.constant 0 : index
    %415 = vector.load %arg16[%c10_172, %c0_173] : memref<12x128xf32, #tpu.memory_space<vmem>>, vector<2x128xf32>
    %416 = arith.truncf %409 : vector<2x32xf32> to vector<2x32xbf16>
    %cst_174 = arith.constant dense<0.000000e+00> : vector<2x128xf32>
    %417 = tpu.matmul %416, %287, %cst_174 {dimension_numbers = #tpu.dot_dimension_numbers<[1], [0], [0], [1], [0, 0, 1, 1], [], []>} : vector<2x32xbf16>, vector<32x128xbf16>, vector<2x128xf32> -> vector<2x128xf32>
    %418 = arith.addf %415, %417 : vector<2x128xf32>
    %cst_175 = arith.constant 0.000000e+00 : f32
    %419 = vector.broadcast %cst_175 : f32 to vector<2x128xf32>
    %420 = arith.subf %419, %418 : vector<2x128xf32>
    %421 = math.exp %420 : vector<2x128xf32>
    %cst_176 = arith.constant 1.000000e+00 : f32
    %422 = vector.broadcast %cst_176 : f32 to vector<2x128xf32>
    %423 = arith.addf %422, %421 : vector<2x128xf32>
    %424 = tpu.reciprocal %423 {approx = true} : vector<2x128xf32> -> vector<2x128xf32>
    %425 = math.tanh %418 : vector<2x128xf32>
    %426 = vector.extract_strided_slice %424 {offsets = [0, 0], sizes = [2, 32], strides = [1, 1]} : vector<2x128xf32> to vector<2x32xf32>
    %427 = vector.extract_strided_slice %424 {offsets = [0, 32], sizes = [2, 32], strides = [1, 1]} : vector<2x128xf32> to vector<2x32xf32>
    %428 = vector.extract_strided_slice %424 {offsets = [0, 64], sizes = [2, 32], strides = [1, 1]} : vector<2x128xf32> to vector<2x32xf32>
    %429 = vector.extract_strided_slice %425 {offsets = [0, 96], sizes = [2, 32], strides = [1, 1]} : vector<2x128xf32> to vector<2x32xf32>
    %430 = arith.mulf %427, %407 : vector<2x32xf32>
    %431 = arith.mulf %426, %429 : vector<2x32xf32>
    %432 = arith.addf %430, %431 : vector<2x32xf32>
    %433 = math.tanh %432 : vector<2x32xf32>
    %434 = arith.mulf %428, %433 : vector<2x32xf32>
    %435 = arith.truncf %434 : vector<2x32xf32> to vector<2x32xbf16>
    %cst_177 = arith.constant dense<0.000000e+00> : vector<2x128xf32>
    %436 = tpu.matmul %435, %288, %cst_177 {dimension_numbers = #tpu.dot_dimension_numbers<[1], [0], [0], [1], [0, 0, 1, 1], [], []>} : vector<2x32xbf16>, vector<32x128xbf16>, vector<2x128xf32> -> vector<2x128xf32>
    %437 = vector.broadcast %289 : vector<1x128xf32> to vector<2x128xf32>
    %438 = arith.addf %436, %437 : vector<2x128xf32>
    %c10_178 = arith.constant 10 : index
    %c0_179 = arith.constant 0 : index
    %439 = vector.load %arg14[%c10_178, %c0_179] : memref<12x128xf32, #tpu.memory_space<vmem>>, vector<2x128xf32>
    tpu.vector_store %arg14[%c10_178, %c0_179], %438 {strides = array<i32>} : memref<12x128xf32, #tpu.memory_space<vmem>>, vector<2x128xf32>,
    return
  }
  func.func @transform_0(%arg0: i32, %arg1: memref<2x6xi32, #tpu.memory_space<smem>>) -> (i32, i32) {
    %c0_i32 = arith.constant 0 : i32
    %c0_i32_0 = arith.constant 0 : i32
    %c0_i32_1 = arith.constant 0 : i32
    return %c0_i32, %c0_i32_0 : i32, i32
  }
  func.func @transform_1(%arg0: i32, %arg1: memref<2x6xi32, #tpu.memory_space<smem>>) -> (i32, i32) {
    %c0_i32 = arith.constant 0 : i32
    %c0_i32_0 = arith.constant 0 : i32
    %c0_i32_1 = arith.constant 0 : i32
    return %c0_i32, %c0_i32_0 : i32, i32
  }
  func.func @transform_2(%arg0: i32, %arg1: memref<2x6xi32, #tpu.memory_space<smem>>) -> (i32, i32) {
    %c0_i32 = arith.constant 0 : i32
    %c0_i32_0 = arith.constant 0 : i32
    %c0_i32_1 = arith.constant 0 : i32
    return %c0_i32, %c0_i32_0 : i32, i32
  }
  func.func @transform_3(%arg0: i32, %arg1: memref<2x6xi32, #tpu.memory_space<smem>>) -> (i32, i32) {
    %c0_i32 = arith.constant 0 : i32
    %c0_i32_0 = arith.constant 0 : i32
    %c0_i32_1 = arith.constant 0 : i32
    return %c0_i32, %c0_i32_0 : i32, i32
  }
  func.func @transform_4(%arg0: i32, %arg1: memref<2x6xi32, #tpu.memory_space<smem>>) -> (i32, i32) {
    %c0_i32 = arith.constant 0 : i32
    %c0_i32_0 = arith.constant 0 : i32
    %c0_i32_1 = arith.constant 0 : i32
    return %c0_i32, %c0_i32_0 : i32, i32
  }
  func.func @transform_5(%arg0: i32, %arg1: memref<2x6xi32, #tpu.memory_space<smem>>) -> (i32, i32) {
    %c0_i32 = arith.constant 0 : i32
    %c0_i32_0 = arith.constant 0 : i32
    %c0_i32_1 = arith.constant 0 : i32
    return %c0_i32, %c0_i32_0 : i32, i32
  }
  func.func @transform_6(%arg0: i32, %arg1: memref<2x6xi32, #tpu.memory_space<smem>>) -> (i32, i32) {
    %c0_i32 = arith.constant 0 : i32
    %c0_i32_0 = arith.constant 0 : i32
    %c0_i32_1 = arith.constant 0 : i32
    return %c0_i32, %c0_i32_0 : i32, i32
  }
  func.func @transform_7(%arg0: i32, %arg1: memref<2x6xi32, #tpu.memory_space<smem>>) -> (i32, i32) {
    %c0_i32 = arith.constant 0 : i32
    %c0_i32_0 = arith.constant 0 : i32
    %c0_i32_1 = arith.constant 0 : i32
    return %c0_i32, %c0_i32_0 : i32, i32
  }
  func.func @transform_8(%arg0: i32, %arg1: memref<2x6xi32, #tpu.memory_space<smem>>) -> (i32, i32) {
    %c0_i32 = arith.constant 0 : i32
    %c0_i32_0 = arith.constant 0 : i32
    %c0_i32_1 = arith.constant 0 : i32
    return %c0_i32, %c0_i32_0 : i32, i32
  }
  func.func @transform_9(%arg0: i32, %arg1: memref<2x6xi32, #tpu.memory_space<smem>>) -> (i32, i32) {
    %c0_i32 = arith.constant 0 : i32
    %c0_i32_0 = arith.constant 0 : i32
    %c0_i32_1 = arith.constant 0 : i32
    return %c0_i32, %c0_i32_0 : i32, i32
  }
  func.func @transform_10(%arg0: i32, %arg1: memref<2x6xi32, #tpu.memory_space<smem>>) -> (i32, i32) {
    %c0_i32 = arith.constant 0 : i32
    %c0_i32_0 = arith.constant 0 : i32
    %c0_i32_1 = arith.constant 0 : i32
    return %c0_i32, %c0_i32_0 : i32, i32
  }
  func.func @transform_11(%arg0: i32, %arg1: memref<2x6xi32, #tpu.memory_space<smem>>) -> (i32, i32) {
    %c0_i32 = arith.constant 0 : i32
    %c0_i32_0 = arith.constant 0 : i32
    %c0_i32_1 = arith.constant 0 : i32
    return %c0_i32, %c0_i32_0 : i32, i32
  }
  func.func @transform_12(%arg0: i32, %arg1: memref<2x6xi32, #tpu.memory_space<smem>>) -> (i32, i32) {
    %c0_i32 = arith.constant 0 : i32
    %c0_i32_0 = arith.constant 0 : i32
    %c0_i32_1 = arith.constant 0 : i32
    return %c0_i32, %c0_i32_0 : i32, i32
  }
}

</mosaic_0001>

<llo_original>
// kernel: encoder_decoder_forward.1
$region0: #{encoder_decoder_forward.1}
  #allocation0 [shape = 'u32[]', space=smem, size = 0x4, offset = 0x4, fixed_abs, tag = 'smem constant byte address 0x4 - core index']
  #allocation1 [shape = 'u32[144,128]{1,0:T(1,128)}', space=vmem, size = 0x12000, scoped, tag = 'internal scratch']
  #allocation2 [shape = 'f32[20,128]{1,0:T(8,128)}', space=vmem, size = 0x3000, scoped, tag = 'scratch operand']
  #allocation3 [shape = 'f32[12,128]{1,0:T(8,128)}', space=vmem, size = 0x2000, scoped, tag = 'scratch operand']
  #allocation4 [shape = 'f32[12,32]{1,0:T(8,128)}', space=vmem, size = 0x2000, scoped, tag = 'scratch operand']
  #allocation5 [shape = 's32[1]{0}', space=sflag, size = 0x4, scoped, tag = 'scoped memory for encoder_decoder_forward.1']
  #allocation6 [shape = 'u8[1024]{0}', space=smem, size = 0x400, scoped, tag = 'prefetched SMEM operand 0']
  %s0 = inlined_call_operand.vmem [shape: s32[2,6], index: 0, kind: input, shape index: {}]
  %s1 = inlined_call_operand.vmem [shape: f32[20,64], index: 1, kind: input, shape index: {}]
  %s2 = inlined_call_operand.vmem [shape: bf16[64,128], index: 2, kind: input, shape index: {}]
  %s3 = inlined_call_operand.vmem [shape: bf16[128,16], index: 3, kind: input, shape index: {}]
  %s4 = inlined_call_operand.vmem [shape: bf16[16,128], index: 4, kind: input, shape index: {}]
  %s5 = inlined_call_operand.vmem [shape: bf16[32,128], index: 5, kind: input, shape index: {}]
  %s6 = inlined_call_operand.vmem [shape: f32[1,128], index: 6, kind: input, shape index: {}]
  %s7 = inlined_call_operand.vmem [shape: f32[40,32], index: 7, kind: input, shape index: {}]
  %s8 = inlined_call_operand.vmem [shape: bf16[32,128], index: 8, kind: input, shape index: {}]
  %s9 = inlined_call_operand.vmem [shape: bf16[32,128], index: 9, kind: input, shape index: {}]
  %s10 = inlined_call_operand.vmem [shape: f32[1,128], index: 10, kind: input, shape index: {}]
  %s11 = inlined_call_operand.vmem [shape: bf16[32,128], index: 11, kind: input, shape index: {}]
  %s12 = inlined_call_operand.vmem [shape: f32[1,128], index: 12, kind: input, shape index: {}]
  %s13 = inlined_call_operand.vmem [shape: f32[12,128], index: 13, kind: output, shape index: {}]
  %s14 = sld [smem:[#allocation0]]
  $region58: #{encoder_decoder_forward.1} parent=0
    _
  %s16 = ssub.s32 1, %s14
  %s17 = scalar_select 0, %s16, %s14
  %s18 = sshll.u32 %s0, 4
  %s19 = int_to_ptr.vmem [resolvable:$true] %s18
  %21 = dma.vmem_to_smem %s19, 32, [#allocation6], [#allocation5]
  %22 = dma.done [#allocation5], 32
  %23 = sfence
  // Predicated region
  $region2: #{encoder_decoder_forward.1} parent=0 // pred_check
    _
  $region3: #{encoder_decoder_forward.1} parent=0 // pred_check_branch
    %25 = sbr.rel (0) target = $region5
  $region4: #{encoder_decoder_forward.1} parent=0 // pred_region
    _
  $region5: #{encoder_decoder_forward.1} parent=0 // pred_fallthru
    _
  // Predicated region
  $region6: #{encoder_decoder_forward.1} parent=0 // pred_check
    _
  $region7: #{encoder_decoder_forward.1} parent=0 // pred_check_branch
    %27 = sbr.rel (0) target = $region9
  $region8: #{encoder_decoder_forward.1} parent=0 // pred_region
    _
  $region9: #{encoder_decoder_forward.1} parent=0 // pred_fallthru
    _
  // Predicated region
  $region10: #{encoder_decoder_forward.1} parent=0 // pred_check
    _
  $region11: #{encoder_decoder_forward.1} parent=0 // pred_check_branch
    %29 = sbr.rel (0) target = $region13
  $region12: #{encoder_decoder_forward.1} parent=0 // pred_region
    _
  $region13: #{encoder_decoder_forward.1} parent=0 // pred_fallthru
    _
  // Predicated region
  $region14: #{encoder_decoder_forward.1} parent=0 // pred_check
    _
  $region15: #{encoder_decoder_forward.1} parent=0 // pred_check_branch
    %31 = sbr.rel (0) target = $region17
  $region16: #{encoder_decoder_forward.1} parent=0 // pred_region
    _
  $region17: #{encoder_decoder_forward.1} parent=0 // pred_fallthru
    _
  // Predicated region
  $region18: #{encoder_decoder_forward.1} parent=0 // pred_check
    _
  $region19: #{encoder_decoder_forward.1} parent=0 // pred_check_branch
    %33 = sbr.rel (0) target = $region21
  $region20: #{encoder_decoder_forward.1} parent=0 // pred_region
    _
  $region21: #{encoder_decoder_forward.1} parent=0 // pred_fallthru
    _
  // Predicated region
  $region22: #{encoder_decoder_forward.1} parent=0 // pred_check
    _
  $region23: #{encoder_decoder_forward.1} parent=0 // pred_check_branch
    %35 = sbr.rel (0) target = $region25
  $region24: #{encoder_decoder_forward.1} parent=0 // pred_region
    _
  $region25: #{encoder_decoder_forward.1} parent=0 // pred_fallthru
    _
  // Predicated region
  $region26: #{encoder_decoder_forward.1} parent=0 // pred_check
    _
  $region27: #{encoder_decoder_forward.1} parent=0 // pred_check_branch
    %37 = sbr.rel (0) target = $region29
  $region28: #{encoder_decoder_forward.1} parent=0 // pred_region
    _
  $region29: #{encoder_decoder_forward.1} parent=0 // pred_fallthru
    _
  // Predicated region
  $region30: #{encoder_decoder_forward.1} parent=0 // pred_check
    _
  $region31: #{encoder_decoder_forward.1} parent=0 // pred_check_branch
    %39 = sbr.rel (0) target = $region33
  $region32: #{encoder_decoder_forward.1} parent=0 // pred_region
    _
  $region33: #{encoder_decoder_forward.1} parent=0 // pred_fallthru
    _
  // Predicated region
  $region34: #{encoder_decoder_forward.1} parent=0 // pred_check
    _
  $region35: #{encoder_decoder_forward.1} parent=0 // pred_check_branch
    %41 = sbr.rel (0) target = $region37
  $region36: #{encoder_decoder_forward.1} parent=0 // pred_region
    _
  $region37: #{encoder_decoder_forward.1} parent=0 // pred_fallthru
    _
  // Predicated region
  $region38: #{encoder_decoder_forward.1} parent=0 // pred_check
    _
  $region39: #{encoder_decoder_forward.1} parent=0 // pred_check_branch
    %43 = sbr.rel (0) target = $region41
  $region40: #{encoder_decoder_forward.1} parent=0 // pred_region
    _
  $region41: #{encoder_decoder_forward.1} parent=0 // pred_fallthru
    _
  // Predicated region
  $region42: #{encoder_decoder_forward.1} parent=0 // pred_check
    _
  $region43: #{encoder_decoder_forward.1} parent=0 // pred_check_branch
    %45 = sbr.rel (0) target = $region45
  $region44: #{encoder_decoder_forward.1} parent=0 // pred_region
    _
  $region45: #{encoder_decoder_forward.1} parent=0 // pred_fallthru
    _
  // Predicated region
  $region46: #{encoder_decoder_forward.1} parent=0 // pred_check
    _
  $region47: #{encoder_decoder_forward.1} parent=0 // pred_check_branch
    %47 = sbr.rel (0) target = $region49
  $region48: #{encoder_decoder_forward.1} parent=0 // pred_region
    _
  $region49: #{encoder_decoder_forward.1} parent=0 // pred_fallthru
    _
  %v49 = vld [vmem:[%s1] sm:$0xff]
  %v50 = vld [vmem:[%s1 + $0x8] sm:$0xff]
  %v51 = vld [vmem:[%s1 + $0x10] sm:$0xf]
  %v52 = vpack.c.bf16 %v50, %v49
  %v53 = vpack.c.bf16 %v51, %v51
  %v54 = vld [vmem:[%s2] sm:$0xf]
  %v55 = vld [vmem:[%s2 + $0x4] sm:$0xf]
  %v56 = vld [vmem:[%s2 + $0x8] sm:$0xf]
  %v57 = vld [vmem:[%s2 + $0xc] sm:$0xf]
  %v58 = vld [vmem:[%s2 + $0x10] sm:$0xf]
  %v59 = vld [vmem:[%s2 + $0x14] sm:$0xf]
  %v60 = vld [vmem:[%s2 + $0x18] sm:$0xf]
  %v61 = vld [vmem:[%s2 + $0x1c] sm:$0xf]
  %v70 = vunpack.c.l.b16 %v54
  %v71 = vunpack.c.l.b16 %v55
  %v72 = vunpack.c.l.b16 %v56
  %v73 = vunpack.c.l.b16 %v57
  %v74 = vunpack.c.l.b16 %v58
  %v75 = vunpack.c.l.b16 %v59
  %v76 = vunpack.c.l.b16 %v60
  %v77 = vunpack.c.l.b16 %v61
  %v78 = vpack.c.b16 %v71, %v70
  %v79 = vpack.c.b16 %v73, %v72
  %v80 = vpack.c.b16 %v75, %v74
  %v81 = vpack.c.b16 %v77, %v76
  %vm86 = vcmask 523264
  %v88 = vsel %vm86, %v52, 0
  %v91 = vsel %vm86, %v53, 0
  %93 = vmatprep.subr.bf16.mxu0 0
  %94 = vmatpush1.bf16.msra.mxu0 %v78
  %95 = vmatprep.subr.bf16.mxu0 0
  %96 = vmatpush1.bf16.msra.mxu0 %v79
  %97 = vmatprep.subr.bf16.mxu0 0
  %98 = vmatpush1.bf16.msra.mxu0 %v80
  %99 = vmatprep.subr.bf16.mxu0 0
  %100 = vmatpush1.bf16.msra.mxu0 %v81
  %101 = vmatprep.subr.bf16.mxu0 0
  %102 = vmatpush1.bf16.msra.mxu0 0
  %103 = vmatprep.subr.bf16.mxu0 0
  %104 = vmatpush1.bf16.msra.mxu0 0
  %105 = vmatprep.subr.bf16.mxu0 0
  %106 = vmatpush1.bf16.msra.mxu0 0
  %107 = vmatprep.subr.bf16.mxu0 0
  %108 = vmatpush1.bf16.msra.mxu0 0
  %109 = vmatprep.subr.bf16.mxu0 0
  %110 = vmatpush1.bf16.msra.mxu0 0
  %111 = vmatprep.subr.bf16.mxu0 0
  %112 = vmatpush1.bf16.msra.mxu0 0
  %113 = vmatprep.subr.bf16.mxu0 0
  %114 = vmatpush1.bf16.msra.mxu0 0
  %115 = vmatprep.subr.bf16.mxu0 0
  %116 = vmatpush1.bf16.msra.mxu0 0
  %117 = vmatprep.subr.bf16.mxu0 0
  %118 = vmatpush1.bf16.msra.mxu0 0
  %119 = vmatprep.subr.bf16.mxu0 0
  %120 = vmatpush1.bf16.msra.mxu0 0
  %121 = vmatprep.subr.bf16.mxu0 0
  %122 = vmatpush1.bf16.msra.mxu0 0
  %123 = vmatprep.subr.bf16.mxu0 0
  %124 = vmatpush1.bf16.msra.mxu0 0
  %125 = vmatprep.mubr.bf16.mxu0 0
  %126 = vmatmul.mubr.bf16.gmra.mrb[0].mxu0 %v88
  %v127 = vpop.f32.mrb[0].mxu0
  %v128 = vadd.f32 0.0, %v127
  %v129 = vpop.f32.mrb[0].mxu0
  %v130 = vpop.f32.mrb[0].mxu0
  %v131 = vadd.f32 0.0, %v130
  %v132 = vpop.f32.mrb[0].mxu0
  %133 = vmatprep.mubr.bf16.mxu0 0
  %134 = vmatmul.mubr.bf16.gmra.mrb[0].mxu0 %v91
  %v135 = vpop.f32.mrb[0].mxu0
  %v136 = vadd.f32 0.0, %v135
  %v137 = vpop.f32.mrb[0].mxu0
  %v138 = vpop.f32.mrb[0].mxu0
  %v139 = vpop.f32.mrb[0].mxu0
  %140 = vdwg.mxu0
  %v141 = vmul.f32 %v128, %v128
  %v142 = vmul.f32 %v131, %v131
  %v143 = vmul.f32 %v136, %v136
  %v144 = vpack.c.bf16 %v142, %v141
  %v145 = vpack.c.bf16 %v143, %v143
  %v146 = vld [vmem:[%s3] sm:$0xf]
  %v147 = vld [vmem:[%s3 + $0x4] sm:$0xf]
  %v148 = vld [vmem:[%s3 + $0x8] sm:$0xf]
  %v149 = vld [vmem:[%s3 + $0xc] sm:$0xf]
  %v150 = vld [vmem:[%s3 + $0x10] sm:$0xf]
  %v151 = vld [vmem:[%s3 + $0x14] sm:$0xf]
  %v152 = vld [vmem:[%s3 + $0x18] sm:$0xf]
  %v153 = vld [vmem:[%s3 + $0x1c] sm:$0xf]
  %v154 = vld [vmem:[%s3 + $0x20] sm:$0xf]
  %v155 = vld [vmem:[%s3 + $0x24] sm:$0xf]
  %v156 = vld [vmem:[%s3 + $0x28] sm:$0xf]
  %v157 = vld [vmem:[%s3 + $0x2c] sm:$0xf]
  %v158 = vld [vmem:[%s3 + $0x30] sm:$0xf]
  %v159 = vld [vmem:[%s3 + $0x34] sm:$0xf]
  %v160 = vld [vmem:[%s3 + $0x38] sm:$0xf]
  %v161 = vld [vmem:[%s3 + $0x3c] sm:$0xf]
  %v178 = vunpack.c.l.b16 %v146
  %v179 = vunpack.c.l.b16 %v147
  %v180 = vunpack.c.l.b16 %v148
  %v181 = vunpack.c.l.b16 %v149
  %v182 = vunpack.c.l.b16 %v150
  %v183 = vunpack.c.l.b16 %v151
  %v184 = vunpack.c.l.b16 %v152
  %v185 = vunpack.c.l.b16 %v153
  %v186 = vunpack.c.l.b16 %v154
  %v187 = vunpack.c.l.b16 %v155
  %v188 = vunpack.c.l.b16 %v156
  %v189 = vunpack.c.l.b16 %v157
  %v190 = vunpack.c.l.b16 %v158
  %v191 = vunpack.c.l.b16 %v159
  %v192 = vunpack.c.l.b16 %v160
  %v193 = vunpack.c.l.b16 %v161
  %v194 = vpack.c.b16 %v179, %v178
  %v195 = vpack.c.b16 %v181, %v180
  %v196 = vpack.c.b16 %v183, %v182
  %v197 = vpack.c.b16 %v185, %v184
  %v198 = vpack.c.b16 %v187, %v186
  %v199 = vpack.c.b16 %v189, %v188
  %v200 = vpack.c.b16 %v191, %v190
  %v201 = vpack.c.b16 %v193, %v192
  %210 = vmatprep.subr.bf16.mxu0 0
  %211 = vmatpush1.bf16.msra.mxu0 %v194
  %212 = vmatprep.subr.bf16.mxu0 0
  %213 = vmatpush1.bf16.msra.mxu0 %v195
  %214 = vmatprep.subr.bf16.mxu0 0
  %215 = vmatpush1.bf16.msra.mxu0 %v196
  %216 = vmatprep.subr.bf16.mxu0 0
  %217 = vmatpush1.bf16.msra.mxu0 %v197
  %218 = vmatprep.subr.bf16.mxu0 0
  %219 = vmatpush1.bf16.msra.mxu0 %v198
  %220 = vmatprep.subr.bf16.mxu0 0
  %221 = vmatpush1.bf16.msra.mxu0 %v199
  %222 = vmatprep.subr.bf16.mxu0 0
  %223 = vmatpush1.bf16.msra.mxu0 %v200
  %224 = vmatprep.subr.bf16.mxu0 0
  %225 = vmatpush1.bf16.msra.mxu0 %v201
  %226 = vmatprep.subr.bf16.mxu0 0
  %227 = vmatpush1.bf16.msra.mxu0 0
  %228 = vmatprep.subr.bf16.mxu0 0
  %229 = vmatpush1.bf16.msra.mxu0 0
  %230 = vmatprep.subr.bf16.mxu0 0
  %231 = vmatpush1.bf16.msra.mxu0 0
  %232 = vmatprep.subr.bf16.mxu0 0
  %233 = vmatpush1.bf16.msra.mxu0 0
  %234 = vmatprep.subr.bf16.mxu0 0
  %235 = vmatpush1.bf16.msra.mxu0 0
  %236 = vmatprep.subr.bf16.mxu0 0
  %237 = vmatpush1.bf16.msra.mxu0 0
  %238 = vmatprep.subr.bf16.mxu0 0
  %239 = vmatpush1.bf16.msra.mxu0 0
  %240 = vmatprep.subr.bf16.mxu0 0
  %241 = vmatpush1.bf16.msra.mxu0 0
  %242 = vmatprep.mubr.bf16.mxu0 0
  %243 = vmatmul.mubr.bf16.gmra.mrb[0].mxu0 %v144
  %v244 = vpop.f32.mrb[0].mxu0
  %v245 = vadd.f32 0.0, %v244
  %v246 = vpop.f32.mrb[0].mxu0
  %v247 = vpop.f32.mrb[0].mxu0
  %v248 = vadd.f32 0.0, %v247
  %v249 = vpop.f32.mrb[0].mxu0
  %250 = vmatprep.mubr.bf16.mxu0 0
  %251 = vmatmul.mubr.bf16.gmra.mrb[0].mxu0 %v145
  %v252 = vpop.f32.mrb[0].mxu0
  %v253 = vadd.f32 0.0, %v252
  %v254 = vpop.f32.mrb[0].mxu0
  %v255 = vpop.f32.mrb[0].mxu0
  %v256 = vpop.f32.mrb[0].mxu0
  %257 = vdwg.mxu0
  %v258 = vmax.f32 %v245, 1e-10
  %v259 = vmax.f32 %v248, 1e-10
  %v260 = vmax.f32 %v253, 1e-10
  %v261 = vlog2.pop %v258
  %v262 = vmul.f32 %v261, 0.6931472
  %v263 = vlog2.pop %v259
  %v264 = vmul.f32 %v263, 0.6931472
  %v265 = vlog2.pop %v260
  %v266 = vmul.f32 %v265, 0.6931472
  %v267 = vmul.f32 %v262, 4.3429446
  %v268 = vmul.f32 %v264, 4.3429446
  %v269 = vmul.f32 %v266, 4.3429446
  %vm270 = vcmask 130048
  %v271 = vsel %vm270, %v267, -inf
  %272 = vmax.xlane.f32.xlu0 %v271
  %v273 = vpop.xlane.xlu0 %272
  %v274 = vsel %vm270, %v268, -inf
  %275 = vmax.xlane.f32.xlu0 %v274
  %v276 = vpop.xlane.xlu0 %275
  %vm277 = vcmask 125952
  %v278 = vsel %vm277, %v269, -inf
  %279 = vmax.xlane.f32.xlu0 %v278
  %v280 = vpop.xlane.xlu0 %279
  %vm281 = vcmask 1043456
  %v282 = vsel %vm281, %v280, -inf
  %v283 = vmax.f32 %v273, %v276
  %v284 = vmax.f32 %v283, %v282
  %v285 = vrot.slane %v284, 4
  %v286 = vmax.f32 %v284, %v285
  %v287 = vrot.slane %v286, 2
  %v288 = vmax.f32 %v286, %v287
  %v289 = vrot.slane %v288, 1
  %v290 = vmax.f32 %v288, %v289
  %v291 = vsub.f32 %v290, 80.0
  %v292 = vmax.f32 %v267, %v291
  %v293 = vmax.f32 %v268, %v291
  %v294 = vmax.f32 %v269, %v291
  %v295 = vpack.c.bf16 %v293, %v292
  %v296 = vpack.c.bf16 %v294, %v294
  %v297 = vld [vmem:[%s4] sm:$0xf]
  %v298 = vld [vmem:[%s4 + $0x4] sm:$0xf]
  %v299 = vld [vmem:[%s6] sm:$0x1]
  %v301 = vlaneseq
  %v302 = vshrl.u32 %v301, 7
  %v303 = vsub.s32 0, %v302
  %v304 = vrot.slane %v299, %v303
  %v308 = vunpack.c.l.b16 %v297
  %v309 = vunpack.c.l.b16 %v298
  %v310 = vpack.c.b16 %v309, %v308
  %v313 = vsel %vm270, %v295, 0
  %v316 = vsel %vm270, %v296, 0
  %318 = vmatprep.subr.bf16.mxu0 0
  %319 = vmatpush1.bf16.msra.mxu0 %v310
  %320 = vmatprep.subr.bf16.mxu0 0
  %321 = vmatpush1.bf16.msra.mxu0 0
  %322 = vmatprep.subr.bf16.mxu0 0
  %323 = vmatpush1.bf16.msra.mxu0 0
  %324 = vmatprep.subr.bf16.mxu0 0
  %325 = vmatpush1.bf16.msra.mxu0 0
  %326 = vmatprep.subr.bf16.mxu0 0
  %327 = vmatpush1.bf16.msra.mxu0 0
  %328 = vmatprep.subr.bf16.mxu0 0
  %329 = vmatpush1.bf16.msra.mxu0 0
  %330 = vmatprep.subr.bf16.mxu0 0
  %331 = vmatpush1.bf16.msra.mxu0 0
  %332 = vmatprep.subr.bf16.mxu0 0
  %333 = vmatpush1.bf16.msra.mxu0 0
  %334 = vmatprep.subr.bf16.mxu0 0
  %335 = vmatpush1.bf16.msra.mxu0 0
  %336 = vmatprep.subr.bf16.mxu0 0
  %337 = vmatpush1.bf16.msra.mxu0 0
  %338 = vmatprep.subr.bf16.mxu0 0
  %339 = vmatpush1.bf16.msra.mxu0 0
  %340 = vmatprep.subr.bf16.mxu0 0
  %341 = vmatpush1.bf16.msra.mxu0 0
  %342 = vmatprep.subr.bf16.mxu0 0
  %343 = vmatpush1.bf16.msra.mxu0 0
  %344 = vmatprep.subr.bf16.mxu0 0
  %345 = vmatpush1.bf16.msra.mxu0 0
  %346 = vmatprep.subr.bf16.mxu0 0
  %347 = vmatpush1.bf16.msra.mxu0 0
  %348 = vmatprep.subr.bf16.mxu0 0
  %349 = vmatpush1.bf16.msra.mxu0 0
  %350 = vmatprep.mubr.bf16.mxu0 0
  %351 = vmatmul.mubr.bf16.gmra.mrb[0].mxu0 %v313
  %v352 = vpop.f32.mrb[0].mxu0
  %v353 = vadd.f32 %v304, %v352
  %v354 = vpop.f32.mrb[0].mxu0
  %v355 = vpop.f32.mrb[0].mxu0
  %v356 = vadd.f32 %v304, %v355
  %v357 = vpop.f32.mrb[0].mxu0
  %358 = vmatprep.mubr.bf16.mxu0 0
  %359 = vmatmul.mubr.bf16.gmra.mrb[0].mxu0 %v316
  %v360 = vpop.f32.mrb[0].mxu0
  %v361 = vadd.f32 %v304, %v360
  %v362 = vpop.f32.mrb[0].mxu0
  %v363 = vpop.f32.mrb[0].mxu0
  %v364 = vpop.f32.mrb[0].mxu0
  %365 = vdwg.mxu0
  %366 = vst [vmem:[#allocation2] sm:$0xff] %v353
  %367 = vst [vmem:[#allocation2 + $0x8] sm:$0xff] %v356
  %368 = vst [vmem:[#allocation2 + $0x10] sm:$0xf] %v361
  %s369 = sld [smem:[#allocation6]]
  %s370 = scalar_lea.vmem %s7, %s369
  %v371 = vld [vmem:[%s370] sm:$0x1]
  %vm372 = vcmask 253952
  %373 = vst.msk [vmem:[#allocation4] sm:$0x1] %vm372, %v371
  %s374 = sld [smem:[#allocation6 + $0x80]]
  %s375 = scalar_lea.vmem %s7, %s374
  %v376 = vld [vmem:[%s375] sm:$0x1]
  %377 = vst.msk [vmem:[#allocation4 + $0x1] sm:$0x1] %vm372, %v376
  %s378 = sld [smem:[#allocation6]]
  %s379 = scalar_lea.vmem %s7, %s378
  %v380 = vld [vmem:[%s379] sm:$0x1]
  %381 = vst.msk [vmem:[#allocation4 + $0x2] sm:$0x1] %vm372, %v380
  %s382 = sld [smem:[#allocation6 + $0x80]]
  %s383 = scalar_lea.vmem %s7, %s382
  %v384 = vld [vmem:[%s383] sm:$0x1]
  %385 = vst.msk [vmem:[#allocation4 + $0x3] sm:$0x1] %vm372, %v384
  %s386 = sld [smem:[#allocation6 + $0x1]]
  %s387 = scalar_lea.vmem %s7, %s386
  %v388 = vld [vmem:[%s387] sm:$0x1]
  %389 = vst.msk [vmem:[#allocation4 + $0x4] sm:$0x1] %vm372, %v388
  %s390 = sld [smem:[#allocation6 + $0x81]]
  %s391 = scalar_lea.vmem %s7, %s390
  %v392 = vld [vmem:[%s391] sm:$0x1]
  %393 = vst.msk [vmem:[#allocation4 + $0x5] sm:$0x1] %vm372, %v392
  %s394 = sld [smem:[#allocation6 + $0x2]]
  %s395 = scalar_lea.vmem %s7, %s394
  %v396 = vld [vmem:[%s395] sm:$0x1]
  %397 = vst.msk [vmem:[#allocation4 + $0x6] sm:$0x1] %vm372, %v396
  %s398 = sld [smem:[#allocation6 + $0x82]]
  %s399 = scalar_lea.vmem %s7, %s398
  %v400 = vld [vmem:[%s399] sm:$0x1]
  %401 = vst.msk [vmem:[#allocation4 + $0x7] sm:$0x1] %vm372, %v400
  %s402 = sld [smem:[#allocation6 + $0x3]]
  %s403 = scalar_lea.vmem %s7, %s402
  %v404 = vld [vmem:[%s403] sm:$0x1]
  %405 = vst.msk [vmem:[#allocation4 + $0x8] sm:$0x1] %vm372, %v404
  %s406 = sld [smem:[#allocation6 + $0x83]]
  %s407 = scalar_lea.vmem %s7, %s406
  %v408 = vld [vmem:[%s407] sm:$0x1]
  %409 = vst.msk [vmem:[#allocation4 + $0x9] sm:$0x1] %vm372, %v408
  %s410 = sld [smem:[#allocation6 + $0x4]]
  %s411 = scalar_lea.vmem %s7, %s410
  %v412 = vld [vmem:[%s411] sm:$0x1]
  %413 = vst.msk [vmem:[#allocation4 + $0xa] sm:$0x1] %vm372, %v412
  %s414 = sld [smem:[#allocation6 + $0x84]]
  %s415 = scalar_lea.vmem %s7, %s414
  %v416 = vld [vmem:[%s415] sm:$0x1]
  %417 = vst.msk [vmem:[#allocation4 + $0xb] sm:$0x1] %vm372, %v416
  %v418 = vld [vmem:[#allocation4] sm:$0xff]
  %v419 = vld [vmem:[#allocation4 + $0x8] sm:$0xf]
  %v420 = vpack.c.bf16 %v419, %v418
  %v421 = vld [vmem:[%s8] sm:$0xf]
  %v422 = vld [vmem:[%s8 + $0x4] sm:$0xf]
  %v423 = vld [vmem:[%s8 + $0x8] sm:$0xf]
  %v424 = vld [vmem:[%s8 + $0xc] sm:$0xf]
  %v425 = vld [vmem:[%s10] sm:$0x1]
  %v427 = vlaneseq
  %v428 = vshrl.u32 %v427, 7
  %v429 = vsub.s32 0, %v428
  %v430 = vrot.slane %v425, %v429
  %v436 = vunpack.c.l.b16 %v421
  %v437 = vunpack.c.l.b16 %v422
  %v438 = vunpack.c.l.b16 %v423
  %v439 = vunpack.c.l.b16 %v424
  %v440 = vpack.c.b16 %v437, %v436
  %v441 = vpack.c.b16 %v439, %v438
  %vm444 = vcmask 261120
  %v446 = vsel %vm444, %v420, 0
  %448 = vmatprep.subr.bf16.mxu0 0
  %449 = vmatpush1.bf16.msra.mxu0 %v440
  %450 = vmatprep.subr.bf16.mxu0 0
  %451 = vmatpush1.bf16.msra.mxu0 %v441
  %452 = vmatprep.subr.bf16.mxu0 0
  %453 = vmatpush1.bf16.msra.mxu0 0
  %454 = vmatprep.subr.bf16.mxu0 0
  %455 = vmatpush1.bf16.msra.mxu0 0
  %456 = vmatprep.subr.bf16.mxu0 0
  %457 = vmatpush1.bf16.msra.mxu0 0
  %458 = vmatprep.subr.bf16.mxu0 0
  %459 = vmatpush1.bf16.msra.mxu0 0
  %460 = vmatprep.subr.bf16.mxu0 0
  %461 = vmatpush1.bf16.msra.mxu0 0
  %462 = vmatprep.subr.bf16.mxu0 0
  %463 = vmatpush1.bf16.msra.mxu0 0
  %464 = vmatprep.subr.bf16.mxu0 0
  %465 = vmatpush1.bf16.msra.mxu0 0
  %466 = vmatprep.subr.bf16.mxu0 0
  %467 = vmatpush1.bf16.msra.mxu0 0
  %468 = vmatprep.subr.bf16.mxu0 0
  %469 = vmatpush1.bf16.msra.mxu0 0
  %470 = vmatprep.subr.bf16.mxu0 0
  %471 = vmatpush1.bf16.msra.mxu0 0
  %472 = vmatprep.subr.bf16.mxu0 0
  %473 = vmatpush1.bf16.msra.mxu0 0
  %474 = vmatprep.subr.bf16.mxu0 0
  %475 = vmatpush1.bf16.msra.mxu0 0
  %476 = vmatprep.subr.bf16.mxu0 0
  %477 = vmatpush1.bf16.msra.mxu0 0
  %478 = vmatprep.subr.bf16.mxu0 0
  %479 = vmatpush1.bf16.msra.mxu0 0
  %480 = vmatprep.mubr.bf16.mxu0 0
  %481 = vmatmul.mubr.bf16.gmra.mrb[0].mxu0 %v446
  %v482 = vpop.f32.mrb[0].mxu0
  %v483 = vadd.f32 %v430, %v482
  %v484 = vpop.f32.mrb[0].mxu0
  %v485 = vpop.f32.mrb[0].mxu0
  %v486 = vadd.f32 %v430, %v485
  %v487 = vpop.f32.mrb[0].mxu0
  %488 = vdwg.mxu0
  %489 = vst [vmem:[#allocation3] sm:$0xff] %v483
  %490 = vst [vmem:[#allocation3 + $0x8] sm:$0xf] %v486
  %v491 = vld [vmem:[%s5] sm:$0xf]
  %v492 = vld [vmem:[%s5 + $0x4] sm:$0xf]
  %v493 = vld [vmem:[%s5 + $0x8] sm:$0xf]
  %v494 = vld [vmem:[%s5 + $0xc] sm:$0xf]
  %v495 = vld [vmem:[#allocation2] sm:$0x3]
  %v500 = vunpack.c.l.b16 %v491
  %v501 = vunpack.c.l.b16 %v492
  %v502 = vunpack.c.l.b16 %v493
  %v503 = vunpack.c.l.b16 %v494
  %v504 = vpack.c.b16 %v501, %v500
  %v505 = vpack.c.b16 %v503, %v502
  %v509 = vsel %vm444, 0, 0
  %511 = vmatprep.subr.bf16.mxu0 0
  %512 = vmatpush1.bf16.msra.mxu0 %v504
  %513 = vmatprep.subr.bf16.mxu0 0
  %514 = vmatpush1.bf16.msra.mxu0 %v505
  %515 = vmatprep.subr.bf16.mxu0 0
  %516 = vmatpush1.bf16.msra.mxu0 0
  %517 = vmatprep.subr.bf16.mxu0 0
  %518 = vmatpush1.bf16.msra.mxu0 0
  %519 = vmatprep.subr.bf16.mxu0 0
  %520 = vmatpush1.bf16.msra.mxu0 0
  %521 = vmatprep.subr.bf16.mxu0 0
  %522 = vmatpush1.bf16.msra.mxu0 0
  %523 = vmatprep.subr.bf16.mxu0 0
  %524 = vmatpush1.bf16.msra.mxu0 0
  %525 = vmatprep.subr.bf16.mxu0 0
  %526 = vmatpush1.bf16.msra.mxu0 0
  %527 = vmatprep.subr.bf16.mxu0 0
  %528 = vmatpush1.bf16.msra.mxu0 0
  %529 = vmatprep.subr.bf16.mxu0 0
  %530 = vmatpush1.bf16.msra.mxu0 0
  %531 = vmatprep.subr.bf16.mxu0 0
  %532 = vmatpush1.bf16.msra.mxu0 0
  %533 = vmatprep.subr.bf16.mxu0 0
  %534 = vmatpush1.bf16.msra.mxu0 0
  %535 = vmatprep.subr.bf16.mxu0 0
  %536 = vmatpush1.bf16.msra.mxu0 0
  %537 = vmatprep.subr.bf16.mxu0 0
  %538 = vmatpush1.bf16.msra.mxu0 0
  %539 = vmatprep.subr.bf16.mxu0 0
  %540 = vmatpush1.bf16.msra.mxu0 0
  %541 = vmatprep.subr.bf16.mxu0 0
  %542 = vmatpush1.bf16.msra.mxu0 0
  %543 = vmatprep.mubr.bf16.mxu0 0
  %544 = vmatmul.mubr.bf16.gmra.mrb[0].mxu0 %v509
  %v545 = vpop.f32.mrb[0].mxu0
  %v546 = vadd.f32 0.0, %v545
  %v547 = vpop.f32.mrb[0].mxu0
  %v548 = vpop.f32.mrb[0].mxu0
  %v549 = vpop.f32.mrb[0].mxu0
  %550 = vdwg.mxu0
  %v551 = vadd.f32 %v495, %v546
  %v552 = vsub.f32 0.0, %v551
  %v553 = vmul.f32 %v552, 1.442695
  %v554 = vpow.pop %v553
  %v555 = vadd.f32 %v554, 1.0
  %v556 = vrcp.pop %v555
  %v557 = vtanh.pop %v551
  %v558 = vmul.f32 %v556, 0.0
  %560 = vrot.lane.b32.xlu0 %v557, 32
  %v561 = vpop.permute.xlu0 %560
  %v563 = vmul.f32 %v556, %v561
  %565 = vrot.lane.b32.xlu0 %v563, 32
  %v566 = vpop.permute.xlu0 %565
  %v568 = vadd.f32 %v558, %v566
  %v569 = vtanh.pop %v568
  %571 = vrot.lane.b32.xlu0 %v569, 32
  %v572 = vpop.permute.xlu0 %571
  %v574 = vmul.f32 %v556, %v572
  %v575 = vld [vmem:[#allocation2 + $0x2] sm:$0x3]
  %v576 = vpack.c.bf16 %v574, %v574
  %578 = vrot.lane.b32.xlu0 %v576, 64
  %v579 = vpop.permute.xlu0 %578
  %v581 = vsel %vm444, %v579, 0
  %583 = vmatprep.subr.bf16.mxu0 0
  %584 = vmatpush1.bf16.msra.mxu0 %v504
  %585 = vmatprep.subr.bf16.mxu0 0
  %586 = vmatpush1.bf16.msra.mxu0 %v505
  %587 = vmatprep.subr.bf16.mxu0 0
  %588 = vmatpush1.bf16.msra.mxu0 0
  %589 = vmatprep.subr.bf16.mxu0 0
  %590 = vmatpush1.bf16.msra.mxu0 0
  %591 = vmatprep.subr.bf16.mxu0 0
  %592 = vmatpush1.bf16.msra.mxu0 0
  %593 = vmatprep.subr.bf16.mxu0 0
  %594 = vmatpush1.bf16.msra.mxu0 0
  %595 = vmatprep.subr.bf16.mxu0 0
  %596 = vmatpush1.bf16.msra.mxu0 0
  %597 = vmatprep.subr.bf16.mxu0 0
  %598 = vmatpush1.bf16.msra.mxu0 0
  %599 = vmatprep.subr.bf16.mxu0 0
  %600 = vmatpush1.bf16.msra.mxu0 0
  %601 = vmatprep.subr.bf16.mxu0 0
  %602 = vmatpush1.bf16.msra.mxu0 0
  %603 = vmatprep.subr.bf16.mxu0 0
  %604 = vmatpush1.bf16.msra.mxu0 0
  %605 = vmatprep.subr.bf16.mxu0 0
  %606 = vmatpush1.bf16.msra.mxu0 0
  %607 = vmatprep.subr.bf16.mxu0 0
  %608 = vmatpush1.bf16.msra.mxu0 0
  %609 = vmatprep.subr.bf16.mxu0 0
  %610 = vmatpush1.bf16.msra.mxu0 0
  %611 = vmatprep.subr.bf16.mxu0 0
  %612 = vmatpush1.bf16.msra.mxu0 0
  %613 = vmatprep.subr.bf16.mxu0 0
  %614 = vmatpush1.bf16.msra.mxu0 0
  %615 = vmatprep.mubr.bf16.mxu0 0
  %616 = vmatmul.mubr.bf16.gmra.mrb[0].mxu0 %v581
  %v617 = vpop.f32.mrb[0].mxu0
  %v618 = vadd.f32 0.0, %v617
  %v619 = vpop.f32.mrb[0].mxu0
  %v620 = vpop.f32.mrb[0].mxu0
  %v621 = vpop.f32.mrb[0].mxu0
  %622 = vdwg.mxu0
  %v623 = vadd.f32 %v575, %v618
  %v624 = vsub.f32 0.0, %v623
  %v625 = vmul.f32 %v624, 1.442695
  %v626 = vpow.pop %v625
  %v627 = vadd.f32 %v626, 1.0
  %v628 = vrcp.pop %v627
  %v629 = vtanh.pop %v623
  %v630 = vmul.f32 %v628, %v568
  %632 = vrot.lane.b32.xlu0 %v629, 32
  %v633 = vpop.permute.xlu0 %632
  %v635 = vmul.f32 %v628, %v633
  %637 = vrot.lane.b32.xlu0 %v635, 32
  %v638 = vpop.permute.xlu0 %637
  %v640 = vadd.f32 %v630, %v638
  %v641 = vtanh.pop %v640
  %643 = vrot.lane.b32.xlu0 %v641, 32
  %v644 = vpop.permute.xlu0 %643
  %v646 = vmul.f32 %v628, %v644
  %v647 = vld [vmem:[#allocation2 + $0x4] sm:$0x3]
  %v648 = vpack.c.bf16 %v646, %v646
  %650 = vrot.lane.b32.xlu0 %v648, 64
  %v651 = vpop.permute.xlu0 %650
  %v653 = vsel %vm444, %v651, 0
  %655 = vmatprep.subr.bf16.mxu0 0
  %656 = vmatpush1.bf16.msra.mxu0 %v504
  %657 = vmatprep.subr.bf16.mxu0 0
  %658 = vmatpush1.bf16.msra.mxu0 %v505
  %659 = vmatprep.subr.bf16.mxu0 0
  %660 = vmatpush1.bf16.msra.mxu0 0
  %661 = vmatprep.subr.bf16.mxu0 0
  %662 = vmatpush1.bf16.msra.mxu0 0
  %663 = vmatprep.subr.bf16.mxu0 0
  %664 = vmatpush1.bf16.msra.mxu0 0
  %665 = vmatprep.subr.bf16.mxu0 0
  %666 = vmatpush1.bf16.msra.mxu0 0
  %667 = vmatprep.subr.bf16.mxu0 0
  %668 = vmatpush1.bf16.msra.mxu0 0
  %669 = vmatprep.subr.bf16.mxu0 0
  %670 = vmatpush1.bf16.msra.mxu0 0
  %671 = vmatprep.subr.bf16.mxu0 0
  %672 = vmatpush1.bf16.msra.mxu0 0
  %673 = vmatprep.subr.bf16.mxu0 0
  %674 = vmatpush1.bf16.msra.mxu0 0
  %675 = vmatprep.subr.bf16.mxu0 0
  %676 = vmatpush1.bf16.msra.mxu0 0
  %677 = vmatprep.subr.bf16.mxu0 0
  %678 = vmatpush1.bf16.msra.mxu0 0
  %679 = vmatprep.subr.bf16.mxu0 0
  %680 = vmatpush1.bf16.msra.mxu0 0
  %681 = vmatprep.subr.bf16.mxu0 0
  %682 = vmatpush1.bf16.msra.mxu0 0
  %683 = vmatprep.subr.bf16.mxu0 0
  %684 = vmatpush1.bf16.msra.mxu0 0
  %685 = vmatprep.subr.bf16.mxu0 0
  %686 = vmatpush1.bf16.msra.mxu0 0
  %687 = vmatprep.mubr.bf16.mxu0 0
  %688 = vmatmul.mubr.bf16.gmra.mrb[0].mxu0 %v653
  %v689 = vpop.f32.mrb[0].mxu0
  %v690 = vadd.f32 0.0, %v689
  %v691 = vpop.f32.mrb[0].mxu0
  %v692 = vpop.f32.mrb[0].mxu0
  %v693 = vpop.f32.mrb[0].mxu0
  %694 = vdwg.mxu0
  %v695 = vadd.f32 %v647, %v690
  %v696 = vsub.f32 0.0, %v695
  %v697 = vmul.f32 %v696, 1.442695
  %v698 = vpow.pop %v697
  %v699 = vadd.f32 %v698, 1.0
  %v700 = vrcp.pop %v699
  %v701 = vtanh.pop %v695
  %v702 = vmul.f32 %v700, %v640
  %704 = vrot.lane.b32.xlu0 %v701, 32
  %v705 = vpop.permute.xlu0 %704
  %v707 = vmul.f32 %v700, %v705
  %709 = vrot.lane.b32.xlu0 %v707, 32
  %v710 = vpop.permute.xlu0 %709
  %v712 = vadd.f32 %v702, %v710
  %v713 = vtanh.pop %v712
  %715 = vrot.lane.b32.xlu0 %v713, 32
  %v716 = vpop.permute.xlu0 %715
  %v718 = vmul.f32 %v700, %v716
  %v719 = vld [vmem:[#allocation2 + $0x6] sm:$0x3]
  %v720 = vpack.c.bf16 %v718, %v718
  %722 = vrot.lane.b32.xlu0 %v720, 64
  %v723 = vpop.permute.xlu0 %722
  %v725 = vsel %vm444, %v723, 0
  %727 = vmatprep.subr.bf16.mxu0 0
  %728 = vmatpush1.bf16.msra.mxu0 %v504
  %729 = vmatprep.subr.bf16.mxu0 0
  %730 = vmatpush1.bf16.msra.mxu0 %v505
  %731 = vmatprep.subr.bf16.mxu0 0
  %732 = vmatpush1.bf16.msra.mxu0 0
  %733 = vmatprep.subr.bf16.mxu0 0
  %734 = vmatpush1.bf16.msra.mxu0 0
  %735 = vmatprep.subr.bf16.mxu0 0
  %736 = vmatpush1.bf16.msra.mxu0 0
  %737 = vmatprep.subr.bf16.mxu0 0
  %738 = vmatpush1.bf16.msra.mxu0 0
  %739 = vmatprep.subr.bf16.mxu0 0
  %740 = vmatpush1.bf16.msra.mxu0 0
  %741 = vmatprep.subr.bf16.mxu0 0
  %742 = vmatpush1.bf16.msra.mxu0 0
  %743 = vmatprep.subr.bf16.mxu0 0
  %744 = vmatpush1.bf16.msra.mxu0 0
  %745 = vmatprep.subr.bf16.mxu0 0
  %746 = vmatpush1.bf16.msra.mxu0 0
  %747 = vmatprep.subr.bf16.mxu0 0
  %748 = vmatpush1.bf16.msra.mxu0 0
  %749 = vmatprep.subr.bf16.mxu0 0
  %750 = vmatpush1.bf16.msra.mxu0 0
  %751 = vmatprep.subr.bf16.mxu0 0
  %752 = vmatpush1.bf16.msra.mxu0 0
  %753 = vmatprep.subr.bf16.mxu0 0
  %754 = vmatpush1.bf16.msra.mxu0 0
  %755 = vmatprep.subr.bf16.mxu0 0
  %756 = vmatpush1.bf16.msra.mxu0 0
  %757 = vmatprep.subr.bf16.mxu0 0
  %758 = vmatpush1.bf16.msra.mxu0 0
  %759 = vmatprep.mubr.bf16.mxu0 0
  %760 = vmatmul.mubr.bf16.gmra.mrb[0].mxu0 %v725
  %v761 = vpop.f32.mrb[0].mxu0
  %v762 = vadd.f32 0.0, %v761
  %v763 = vpop.f32.mrb[0].mxu0
  %v764 = vpop.f32.mrb[0].mxu0
  %v765 = vpop.f32.mrb[0].mxu0
  %766 = vdwg.mxu0
  %v767 = vadd.f32 %v719, %v762
  %v768 = vsub.f32 0.0, %v767
  %v769 = vmul.f32 %v768, 1.442695
  %v770 = vpow.pop %v769
  %v771 = vadd.f32 %v770, 1.0
  %v772 = vrcp.pop %v771
  %v773 = vtanh.pop %v767
  %v774 = vmul.f32 %v772, %v712
  %776 = vrot.lane.b32.xlu0 %v773, 32
  %v777 = vpop.permute.xlu0 %776
  %v779 = vmul.f32 %v772, %v777
  %781 = vrot.lane.b32.xlu0 %v779, 32
  %v782 = vpop.permute.xlu0 %781
  %v784 = vadd.f32 %v774, %v782
  %v785 = vtanh.pop %v784
  %787 = vrot.lane.b32.xlu0 %v785, 32
  %v788 = vpop.permute.xlu0 %787
  %v790 = vmul.f32 %v772, %v788
  %v791 = vld [vmem:[#allocation2 + $0x8] sm:$0x3]
  %v792 = vpack.c.bf16 %v790, %v790
  %794 = vrot.lane.b32.xlu0 %v792, 64
  %v795 = vpop.permute.xlu0 %794
  %v797 = vsel %vm444, %v795, 0
  %799 = vmatprep.subr.bf16.mxu0 0
  %800 = vmatpush1.bf16.msra.mxu0 %v504
  %801 = vmatprep.subr.bf16.mxu0 0
  %802 = vmatpush1.bf16.msra.mxu0 %v505
  %803 = vmatprep.subr.bf16.mxu0 0
  %804 = vmatpush1.bf16.msra.mxu0 0
  %805 = vmatprep.subr.bf16.mxu0 0
  %806 = vmatpush1.bf16.msra.mxu0 0
  %807 = vmatprep.subr.bf16.mxu0 0
  %808 = vmatpush1.bf16.msra.mxu0 0
  %809 = vmatprep.subr.bf16.mxu0 0
  %810 = vmatpush1.bf16.msra.mxu0 0
  %811 = vmatprep.subr.bf16.mxu0 0
  %812 = vmatpush1.bf16.msra.mxu0 0
  %813 = vmatprep.subr.bf16.mxu0 0
  %814 = vmatpush1.bf16.msra.mxu0 0
  %815 = vmatprep.subr.bf16.mxu0 0
  %816 = vmatpush1.bf16.msra.mxu0 0
  %817 = vmatprep.subr.bf16.mxu0 0
  %818 = vmatpush1.bf16.msra.mxu0 0
  %819 = vmatprep.subr.bf16.mxu0 0
  %820 = vmatpush1.bf16.msra.mxu0 0
  %821 = vmatprep.subr.bf16.mxu0 0
  %822 = vmatpush1.bf16.msra.mxu0 0
  %823 = vmatprep.subr.bf16.mxu0 0
  %824 = vmatpush1.bf16.msra.mxu0 0
  %825 = vmatprep.subr.bf16.mxu0 0
  %826 = vmatpush1.bf16.msra.mxu0 0
  %827 = vmatprep.subr.bf16.mxu0 0
  %828 = vmatpush1.bf16.msra.mxu0 0
  %829 = vmatprep.subr.bf16.mxu0 0
  %830 = vmatpush1.bf16.msra.mxu0 0
  %831 = vmatprep.mubr.bf16.mxu0 0
  %832 = vmatmul.mubr.bf16.gmra.mrb[0].mxu0 %v797
  %v833 = vpop.f32.mrb[0].mxu0
  %v834 = vadd.f32 0.0, %v833
  %v835 = vpop.f32.mrb[0].mxu0
  %v836 = vpop.f32.mrb[0].mxu0
  %v837 = vpop.f32.mrb[0].mxu0
  %838 = vdwg.mxu0
  %v839 = vadd.f32 %v791, %v834
  %v840 = vsub.f32 0.0, %v839
  %v841 = vmul.f32 %v840, 1.442695
  %v842 = vpow.pop %v841
  %v843 = vadd.f32 %v842, 1.0
  %v844 = vrcp.pop %v843
  %v845 = vtanh.pop %v839
  %v846 = vmul.f32 %v844, %v784
  %848 = vrot.lane.b32.xlu0 %v845, 32
  %v849 = vpop.permute.xlu0 %848
  %v851 = vmul.f32 %v844, %v849
  %853 = vrot.lane.b32.xlu0 %v851, 32
  %v854 = vpop.permute.xlu0 %853
  %v856 = vadd.f32 %v846, %v854
  %v857 = vtanh.pop %v856
  %859 = vrot.lane.b32.xlu0 %v857, 32
  %v860 = vpop.permute.xlu0 %859
  %v862 = vmul.f32 %v844, %v860
  %v863 = vld [vmem:[#allocation2 + $0xa] sm:$0x3]
  %v864 = vpack.c.bf16 %v862, %v862
  %866 = vrot.lane.b32.xlu0 %v864, 64
  %v867 = vpop.permute.xlu0 %866
  %v869 = vsel %vm444, %v867, 0
  %871 = vmatprep.subr.bf16.mxu0 0
  %872 = vmatpush1.bf16.msra.mxu0 %v504
  %873 = vmatprep.subr.bf16.mxu0 0
  %874 = vmatpush1.bf16.msra.mxu0 %v505
  %875 = vmatprep.subr.bf16.mxu0 0
  %876 = vmatpush1.bf16.msra.mxu0 0
  %877 = vmatprep.subr.bf16.mxu0 0
  %878 = vmatpush1.bf16.msra.mxu0 0
  %879 = vmatprep.subr.bf16.mxu0 0
  %880 = vmatpush1.bf16.msra.mxu0 0
  %881 = vmatprep.subr.bf16.mxu0 0
  %882 = vmatpush1.bf16.msra.mxu0 0
  %883 = vmatprep.subr.bf16.mxu0 0
  %884 = vmatpush1.bf16.msra.mxu0 0
  %885 = vmatprep.subr.bf16.mxu0 0
  %886 = vmatpush1.bf16.msra.mxu0 0
  %887 = vmatprep.subr.bf16.mxu0 0
  %888 = vmatpush1.bf16.msra.mxu0 0
  %889 = vmatprep.subr.bf16.mxu0 0
  %890 = vmatpush1.bf16.msra.mxu0 0
  %891 = vmatprep.subr.bf16.mxu0 0
  %892 = vmatpush1.bf16.msra.mxu0 0
  %893 = vmatprep.subr.bf16.mxu0 0
  %894 = vmatpush1.bf16.msra.mxu0 0
  %895 = vmatprep.subr.bf16.mxu0 0
  %896 = vmatpush1.bf16.msra.mxu0 0
  %897 = vmatprep.subr.bf16.mxu0 0
  %898 = vmatpush1.bf16.msra.mxu0 0
  %899 = vmatprep.subr.bf16.mxu0 0
  %900 = vmatpush1.bf16.msra.mxu0 0
  %901 = vmatprep.subr.bf16.mxu0 0
  %902 = vmatpush1.bf16.msra.mxu0 0
  %903 = vmatprep.mubr.bf16.mxu0 0
  %904 = vmatmul.mubr.bf16.gmra.mrb[0].mxu0 %v869
  %v905 = vpop.f32.mrb[0].mxu0
  %v906 = vadd.f32 0.0, %v905
  %v907 = vpop.f32.mrb[0].mxu0
  %v908 = vpop.f32.mrb[0].mxu0
  %v909 = vpop.f32.mrb[0].mxu0
  %910 = vdwg.mxu0
  %v911 = vadd.f32 %v863, %v906
  %v912 = vsub.f32 0.0, %v911
  %v913 = vmul.f32 %v912, 1.442695
  %v914 = vpow.pop %v913
  %v915 = vadd.f32 %v914, 1.0
  %v916 = vrcp.pop %v915
  %v917 = vtanh.pop %v911
  %v918 = vmul.f32 %v916, %v856
  %920 = vrot.lane.b32.xlu0 %v917, 32
  %v921 = vpop.permute.xlu0 %920
  %v923 = vmul.f32 %v916, %v921
  %925 = vrot.lane.b32.xlu0 %v923, 32
  %v926 = vpop.permute.xlu0 %925
  %v928 = vadd.f32 %v918, %v926
  %v929 = vtanh.pop %v928
  %931 = vrot.lane.b32.xlu0 %v929, 32
  %v932 = vpop.permute.xlu0 %931
  %v934 = vmul.f32 %v916, %v932
  %v935 = vld [vmem:[#allocation2 + $0xc] sm:$0x3]
  %v936 = vpack.c.bf16 %v934, %v934
  %938 = vrot.lane.b32.xlu0 %v936, 64
  %v939 = vpop.permute.xlu0 %938
  %v941 = vsel %vm444, %v939, 0
  %943 = vmatprep.subr.bf16.mxu0 0
  %944 = vmatpush1.bf16.msra.mxu0 %v504
  %945 = vmatprep.subr.bf16.mxu0 0
  %946 = vmatpush1.bf16.msra.mxu0 %v505
  %947 = vmatprep.subr.bf16.mxu0 0
  %948 = vmatpush1.bf16.msra.mxu0 0
  %949 = vmatprep.subr.bf16.mxu0 0
  %950 = vmatpush1.bf16.msra.mxu0 0
  %951 = vmatprep.subr.bf16.mxu0 0
  %952 = vmatpush1.bf16.msra.mxu0 0
  %953 = vmatprep.subr.bf16.mxu0 0
  %954 = vmatpush1.bf16.msra.mxu0 0
  %955 = vmatprep.subr.bf16.mxu0 0
  %956 = vmatpush1.bf16.msra.mxu0 0
  %957 = vmatprep.subr.bf16.mxu0 0
  %958 = vmatpush1.bf16.msra.mxu0 0
  %959 = vmatprep.subr.bf16.mxu0 0
  %960 = vmatpush1.bf16.msra.mxu0 0
  %961 = vmatprep.subr.bf16.mxu0 0
  %962 = vmatpush1.bf16.msra.mxu0 0
  %963 = vmatprep.subr.bf16.mxu0 0
  %964 = vmatpush1.bf16.msra.mxu0 0
  %965 = vmatprep.subr.bf16.mxu0 0
  %966 = vmatpush1.bf16.msra.mxu0 0
  %967 = vmatprep.subr.bf16.mxu0 0
  %968 = vmatpush1.bf16.msra.mxu0 0
  %969 = vmatprep.subr.bf16.mxu0 0
  %970 = vmatpush1.bf16.msra.mxu0 0
  %971 = vmatprep.subr.bf16.mxu0 0
  %972 = vmatpush1.bf16.msra.mxu0 0
  %973 = vmatprep.subr.bf16.mxu0 0
  %974 = vmatpush1.bf16.msra.mxu0 0
  %975 = vmatprep.mubr.bf16.mxu0 0
  %976 = vmatmul.mubr.bf16.gmra.mrb[0].mxu0 %v941
  %v977 = vpop.f32.mrb[0].mxu0
  %v978 = vadd.f32 0.0, %v977
  %v979 = vpop.f32.mrb[0].mxu0
  %v980 = vpop.f32.mrb[0].mxu0
  %v981 = vpop.f32.mrb[0].mxu0
  %982 = vdwg.mxu0
  %v983 = vadd.f32 %v935, %v978
  %v984 = vsub.f32 0.0, %v983
  %v985 = vmul.f32 %v984, 1.442695
  %v986 = vpow.pop %v985
  %v987 = vadd.f32 %v986, 1.0
  %v988 = vrcp.pop %v987
  %v989 = vtanh.pop %v983
  %v990 = vmul.f32 %v988, %v928
  %992 = vrot.lane.b32.xlu0 %v989, 32
  %v993 = vpop.permute.xlu0 %992
  %v995 = vmul.f32 %v988, %v993
  %997 = vrot.lane.b32.xlu0 %v995, 32
  %v998 = vpop.permute.xlu0 %997
  %v1000 = vadd.f32 %v990, %v998
  %v1001 = vtanh.pop %v1000
  %1003 = vrot.lane.b32.xlu0 %v1001, 32
  %v1004 = vpop.permute.xlu0 %1003
  %v1006 = vmul.f32 %v988, %v1004
  %v1007 = vld [vmem:[#allocation2 + $0xe] sm:$0x3]
  %v1008 = vpack.c.bf16 %v1006, %v1006
  %1010 = vrot.lane.b32.xlu0 %v1008, 64
  %v1011 = vpop.permute.xlu0 %1010
  %v1013 = vsel %vm444, %v1011, 0
  %1015 = vmatprep.subr.bf16.mxu0 0
  %1016 = vmatpush1.bf16.msra.mxu0 %v504
  %1017 = vmatprep.subr.bf16.mxu0 0
  %1018 = vmatpush1.bf16.msra.mxu0 %v505
  %1019 = vmatprep.subr.bf16.mxu0 0
  %1020 = vmatpush1.bf16.msra.mxu0 0
  %1021 = vmatprep.subr.bf16.mxu0 0
  %1022 = vmatpush1.bf16.msra.mxu0 0
  %1023 = vmatprep.subr.bf16.mxu0 0
  %1024 = vmatpush1.bf16.msra.mxu0 0
  %1025 = vmatprep.subr.bf16.mxu0 0
  %1026 = vmatpush1.bf16.msra.mxu0 0
  %1027 = vmatprep.subr.bf16.mxu0 0
  %1028 = vmatpush1.bf16.msra.mxu0 0
  %1029 = vmatprep.subr.bf16.mxu0 0
  %1030 = vmatpush1.bf16.msra.mxu0 0
  %1031 = vmatprep.subr.bf16.mxu0 0
  %1032 = vmatpush1.bf16.msra.mxu0 0
  %1033 = vmatprep.subr.bf16.mxu0 0
  %1034 = vmatpush1.bf16.msra.mxu0 0
  %1035 = vmatprep.subr.bf16.mxu0 0
  %1036 = vmatpush1.bf16.msra.mxu0 0
  %1037 = vmatprep.subr.bf16.mxu0 0
  %1038 = vmatpush1.bf16.msra.mxu0 0
  %1039 = vmatprep.subr.bf16.mxu0 0
  %1040 = vmatpush1.bf16.msra.mxu0 0
  %1041 = vmatprep.subr.bf16.mxu0 0
  %1042 = vmatpush1.bf16.msra.mxu0 0
  %1043 = vmatprep.subr.bf16.mxu0 0
  %1044 = vmatpush1.bf16.msra.mxu0 0
  %1045 = vmatprep.subr.bf16.mxu0 0
  %1046 = vmatpush1.bf16.msra.mxu0 0
  %1047 = vmatprep.mubr.bf16.mxu0 0
  %1048 = vmatmul.mubr.bf16.gmra.mrb[0].mxu0 %v1013
  %v1049 = vpop.f32.mrb[0].mxu0
  %v1050 = vadd.f32 0.0, %v1049
  %v1051 = vpop.f32.mrb[0].mxu0
  %v1052 = vpop.f32.mrb[0].mxu0
  %v1053 = vpop.f32.mrb[0].mxu0
  %1054 = vdwg.mxu0
  %v1055 = vadd.f32 %v1007, %v1050
  %v1056 = vsub.f32 0.0, %v1055
  %v1057 = vmul.f32 %v1056, 1.442695
  %v1058 = vpow.pop %v1057
  %v1059 = vadd.f32 %v1058, 1.0
  %v1060 = vrcp.pop %v1059
  %v1061 = vtanh.pop %v1055
  %v1062 = vmul.f32 %v1060, %v1000
  %1064 = vrot.lane.b32.xlu0 %v1061, 32
  %v1065 = vpop.permute.xlu0 %1064
  %v1067 = vmul.f32 %v1060, %v1065
  %1069 = vrot.lane.b32.xlu0 %v1067, 32
  %v1070 = vpop.permute.xlu0 %1069
  %v1072 = vadd.f32 %v1062, %v1070
  %v1073 = vtanh.pop %v1072
  %1075 = vrot.lane.b32.xlu0 %v1073, 32
  %v1076 = vpop.permute.xlu0 %1075
  %v1078 = vmul.f32 %v1060, %v1076
  %v1079 = vld [vmem:[#allocation2 + $0x10] sm:$0x3]
  %v1080 = vpack.c.bf16 %v1078, %v1078
  %1082 = vrot.lane.b32.xlu0 %v1080, 64
  %v1083 = vpop.permute.xlu0 %1082
  %v1085 = vsel %vm444, %v1083, 0
  %1087 = vmatprep.subr.bf16.mxu0 0
  %1088 = vmatpush1.bf16.msra.mxu0 %v504
  %1089 = vmatprep.subr.bf16.mxu0 0
  %1090 = vmatpush1.bf16.msra.mxu0 %v505
  %1091 = vmatprep.subr.bf16.mxu0 0
  %1092 = vmatpush1.bf16.msra.mxu0 0
  %1093 = vmatprep.subr.bf16.mxu0 0
  %1094 = vmatpush1.bf16.msra.mxu0 0
  %1095 = vmatprep.subr.bf16.mxu0 0
  %1096 = vmatpush1.bf16.msra.mxu0 0
  %1097 = vmatprep.subr.bf16.mxu0 0
  %1098 = vmatpush1.bf16.msra.mxu0 0
  %1099 = vmatprep.subr.bf16.mxu0 0
  %1100 = vmatpush1.bf16.msra.mxu0 0
  %1101 = vmatprep.subr.bf16.mxu0 0
  %1102 = vmatpush1.bf16.msra.mxu0 0
  %1103 = vmatprep.subr.bf16.mxu0 0
  %1104 = vmatpush1.bf16.msra.mxu0 0
  %1105 = vmatprep.subr.bf16.mxu0 0
  %1106 = vmatpush1.bf16.msra.mxu0 0
  %1107 = vmatprep.subr.bf16.mxu0 0
  %1108 = vmatpush1.bf16.msra.mxu0 0
  %1109 = vmatprep.subr.bf16.mxu0 0
  %1110 = vmatpush1.bf16.msra.mxu0 0
  %1111 = vmatprep.subr.bf16.mxu0 0
  %1112 = vmatpush1.bf16.msra.mxu0 0
  %1113 = vmatprep.subr.bf16.mxu0 0
  %1114 = vmatpush1.bf16.msra.mxu0 0
  %1115 = vmatprep.subr.bf16.mxu0 0
  %1116 = vmatpush1.bf16.msra.mxu0 0
  %1117 = vmatprep.subr.bf16.mxu0 0
  %1118 = vmatpush1.bf16.msra.mxu0 0
  %1119 = vmatprep.mubr.bf16.mxu0 0
  %1120 = vmatmul.mubr.bf16.gmra.mrb[0].mxu0 %v1085
  %v1121 = vpop.f32.mrb[0].mxu0
  %v1122 = vadd.f32 0.0, %v1121
  %v1123 = vpop.f32.mrb[0].mxu0
  %v1124 = vpop.f32.mrb[0].mxu0
  %v1125 = vpop.f32.mrb[0].mxu0
  %1126 = vdwg.mxu0
  %v1127 = vadd.f32 %v1079, %v1122
  %v1128 = vsub.f32 0.0, %v1127
  %v1129 = vmul.f32 %v1128, 1.442695
  %v1130 = vpow.pop %v1129
  %v1131 = vadd.f32 %v1130, 1.0
  %v1132 = vrcp.pop %v1131
  %v1133 = vtanh.pop %v1127
  %v1134 = vmul.f32 %v1132, %v1072
  %1136 = vrot.lane.b32.xlu0 %v1133, 32
  %v1137 = vpop.permute.xlu0 %1136
  %v1139 = vmul.f32 %v1132, %v1137
  %1141 = vrot.lane.b32.xlu0 %v1139, 32
  %v1142 = vpop.permute.xlu0 %1141
  %v1144 = vadd.f32 %v1134, %v1142
  %v1145 = vtanh.pop %v1144
  %1147 = vrot.lane.b32.xlu0 %v1145, 32
  %v1148 = vpop.permute.xlu0 %1147
  %v1150 = vmul.f32 %v1132, %v1148
  %v1151 = vld [vmem:[#allocation2 + $0x12] sm:$0x3]
  %v1152 = vpack.c.bf16 %v1150, %v1150
  %1154 = vrot.lane.b32.xlu0 %v1152, 64
  %v1155 = vpop.permute.xlu0 %1154
  %v1157 = vsel %vm444, %v1155, 0
  %1159 = vmatprep.subr.bf16.mxu0 0
  %1160 = vmatpush1.bf16.msra.mxu0 %v504
  %1161 = vmatprep.subr.bf16.mxu0 0
  %1162 = vmatpush1.bf16.msra.mxu0 %v505
  %1163 = vmatprep.subr.bf16.mxu0 0
  %1164 = vmatpush1.bf16.msra.mxu0 0
  %1165 = vmatprep.subr.bf16.mxu0 0
  %1166 = vmatpush1.bf16.msra.mxu0 0
  %1167 = vmatprep.subr.bf16.mxu0 0
  %1168 = vmatpush1.bf16.msra.mxu0 0
  %1169 = vmatprep.subr.bf16.mxu0 0
  %1170 = vmatpush1.bf16.msra.mxu0 0
  %1171 = vmatprep.subr.bf16.mxu0 0
  %1172 = vmatpush1.bf16.msra.mxu0 0
  %1173 = vmatprep.subr.bf16.mxu0 0
  %1174 = vmatpush1.bf16.msra.mxu0 0
  %1175 = vmatprep.subr.bf16.mxu0 0
  %1176 = vmatpush1.bf16.msra.mxu0 0
  %1177 = vmatprep.subr.bf16.mxu0 0
  %1178 = vmatpush1.bf16.msra.mxu0 0
  %1179 = vmatprep.subr.bf16.mxu0 0
  %1180 = vmatpush1.bf16.msra.mxu0 0
  %1181 = vmatprep.subr.bf16.mxu0 0
  %1182 = vmatpush1.bf16.msra.mxu0 0
  %1183 = vmatprep.subr.bf16.mxu0 0
  %1184 = vmatpush1.bf16.msra.mxu0 0
  %1185 = vmatprep.subr.bf16.mxu0 0
  %1186 = vmatpush1.bf16.msra.mxu0 0
  %1187 = vmatprep.subr.bf16.mxu0 0
  %1188 = vmatpush1.bf16.msra.mxu0 0
  %1189 = vmatprep.subr.bf16.mxu0 0
  %1190 = vmatpush1.bf16.msra.mxu0 0
  %1191 = vmatprep.mubr.bf16.mxu0 0
  %1192 = vmatmul.mubr.bf16.gmra.mrb[0].mxu0 %v1157
  %v1193 = vpop.f32.mrb[0].mxu0
  %v1194 = vadd.f32 0.0, %v1193
  %v1195 = vpop.f32.mrb[0].mxu0
  %v1196 = vpop.f32.mrb[0].mxu0
  %v1197 = vpop.f32.mrb[0].mxu0
  %1198 = vdwg.mxu0
  %v1199 = vadd.f32 %v1151, %v1194
  %v1200 = vsub.f32 0.0, %v1199
  %v1201 = vmul.f32 %v1200, 1.442695
  %v1202 = vpow.pop %v1201
  %v1203 = vadd.f32 %v1202, 1.0
  %v1204 = vrcp.pop %v1203
  %v1205 = vtanh.pop %v1199
  %v1206 = vmul.f32 %v1204, %v1144
  %1208 = vrot.lane.b32.xlu0 %v1205, 32
  %v1209 = vpop.permute.xlu0 %1208
  %v1211 = vmul.f32 %v1204, %v1209
  %1213 = vrot.lane.b32.xlu0 %v1211, 32
  %v1214 = vpop.permute.xlu0 %1213
  %v1216 = vadd.f32 %v1206, %v1214
  %v1217 = vtanh.pop %v1216
  %1219 = vrot.lane.b32.xlu0 %v1217, 32
  %v1220 = vpop.permute.xlu0 %1219
  %v1222 = vmul.f32 %v1204, %v1220
  %v1223 = vld [vmem:[%s9] sm:$0xf]
  %v1224 = vld [vmem:[%s9 + $0x4] sm:$0xf]
  %v1225 = vld [vmem:[%s9 + $0x8] sm:$0xf]
  %v1226 = vld [vmem:[%s9 + $0xc] sm:$0xf]
  %v1227 = vld [vmem:[%s11] sm:$0xf]
  %v1228 = vld [vmem:[%s11 + $0x4] sm:$0xf]
  %v1229 = vld [vmem:[%s11 + $0x8] sm:$0xf]
  %v1230 = vld [vmem:[%s11 + $0xc] sm:$0xf]
  %v1231 = vld [vmem:[%s12] sm:$0x1]
  %v1232 = vld [vmem:[#allocation3] sm:$0x3]
  %v1233 = vpack.c.bf16 %v1222, %v1222
  %1235 = vrot.lane.b32.xlu0 %v1233, 64
  %v1236 = vpop.permute.xlu0 %1235
  %v1241 = vunpack.c.l.b16 %v1223
  %v1242 = vunpack.c.l.b16 %v1224
  %v1243 = vunpack.c.l.b16 %v1225
  %v1244 = vunpack.c.l.b16 %v1226
  %v1245 = vpack.c.b16 %v1242, %v1241
  %v1246 = vpack.c.b16 %v1244, %v1243
  %v1250 = vsel %vm444, %v1236, 0
  %1252 = vmatprep.subr.bf16.mxu0 0
  %1253 = vmatpush1.bf16.msra.mxu0 %v1245
  %1254 = vmatprep.subr.bf16.mxu0 0
  %1255 = vmatpush1.bf16.msra.mxu0 %v1246
  %1256 = vmatprep.subr.bf16.mxu0 0
  %1257 = vmatpush1.bf16.msra.mxu0 0
  %1258 = vmatprep.subr.bf16.mxu0 0
  %1259 = vmatpush1.bf16.msra.mxu0 0
  %1260 = vmatprep.subr.bf16.mxu0 0
  %1261 = vmatpush1.bf16.msra.mxu0 0
  %1262 = vmatprep.subr.bf16.mxu0 0
  %1263 = vmatpush1.bf16.msra.mxu0 0
  %1264 = vmatprep.subr.bf16.mxu0 0
  %1265 = vmatpush1.bf16.msra.mxu0 0
  %1266 = vmatprep.subr.bf16.mxu0 0
  %1267 = vmatpush1.bf16.msra.mxu0 0
  %1268 = vmatprep.subr.bf16.mxu0 0
  %1269 = vmatpush1.bf16.msra.mxu0 0
  %1270 = vmatprep.subr.bf16.mxu0 0
  %1271 = vmatpush1.bf16.msra.mxu0 0
  %1272 = vmatprep.subr.bf16.mxu0 0
  %1273 = vmatpush1.bf16.msra.mxu0 0
  %1274 = vmatprep.subr.bf16.mxu0 0
  %1275 = vmatpush1.bf16.msra.mxu0 0
  %1276 = vmatprep.subr.bf16.mxu0 0
  %1277 = vmatpush1.bf16.msra.mxu0 0
  %1278 = vmatprep.subr.bf16.mxu0 0
  %1279 = vmatpush1.bf16.msra.mxu0 0
  %1280 = vmatprep.subr.bf16.mxu0 0
  %1281 = vmatpush1.bf16.msra.mxu0 0
  %1282 = vmatprep.subr.bf16.mxu0 0
  %1283 = vmatpush1.bf16.msra.mxu0 0
  %1284 = vmatprep.mubr.bf16.mxu0 0
  %1285 = vmatmul.mubr.bf16.gmra.mrb[0].mxu0 %v1250
  %v1286 = vpop.f32.mrb[0].mxu0
  %v1287 = vadd.f32 0.0, %v1286
  %v1288 = vpop.f32.mrb[0].mxu0
  %v1289 = vpop.f32.mrb[0].mxu0
  %v1290 = vpop.f32.mrb[0].mxu0
  %1291 = vdwg.mxu0
  %v1292 = vadd.f32 %v1232, %v1287
  %v1293 = vsub.f32 0.0, %v1292
  %v1294 = vmul.f32 %v1293, 1.442695
  %v1295 = vpow.pop %v1294
  %v1296 = vadd.f32 %v1295, 1.0
  %v1297 = vrcp.pop %v1296
  %v1298 = vtanh.pop %v1292
  %v1299 = vmul.f32 %v1297, %v1216
  %1301 = vrot.lane.b32.xlu0 %v1298, 32
  %v1302 = vpop.permute.xlu0 %1301
  %v1304 = vmul.f32 %v1297, %v1302
  %1306 = vrot.lane.b32.xlu0 %v1304, 32
  %v1307 = vpop.permute.xlu0 %1306
  %v1309 = vadd.f32 %v1299, %v1307
  %v1310 = vtanh.pop %v1309
  %1312 = vrot.lane.b32.xlu0 %v1310, 32
  %v1313 = vpop.permute.xlu0 %1312
  %v1315 = vmul.f32 %v1297, %v1313
  %v1316 = vpack.c.bf16 %v1315, %v1315
  %v1318 = vlaneseq
  %v1319 = vshrl.u32 %v1318, 7
  %v1320 = vsub.s32 0, %v1319
  %v1321 = vrot.slane %v1231, %v1320
  %1324 = vrot.lane.b32.xlu0 %v1316, 64
  %v1325 = vpop.permute.xlu0 %1324
  %v1330 = vunpack.c.l.b16 %v1227
  %v1331 = vunpack.c.l.b16 %v1228
  %v1332 = vunpack.c.l.b16 %v1229
  %v1333 = vunpack.c.l.b16 %v1230
  %v1334 = vpack.c.b16 %v1331, %v1330
  %v1335 = vpack.c.b16 %v1333, %v1332
  %v1339 = vsel %vm444, %v1325, 0
  %1341 = vmatprep.subr.bf16.mxu0 0
  %1342 = vmatpush1.bf16.msra.mxu0 %v1334
  %1343 = vmatprep.subr.bf16.mxu0 0
  %1344 = vmatpush1.bf16.msra.mxu0 %v1335
  %1345 = vmatprep.subr.bf16.mxu0 0
  %1346 = vmatpush1.bf16.msra.mxu0 0
  %1347 = vmatprep.subr.bf16.mxu0 0
  %1348 = vmatpush1.bf16.msra.mxu0 0
  %1349 = vmatprep.subr.bf16.mxu0 0
  %1350 = vmatpush1.bf16.msra.mxu0 0
  %1351 = vmatprep.subr.bf16.mxu0 0
  %1352 = vmatpush1.bf16.msra.mxu0 0
  %1353 = vmatprep.subr.bf16.mxu0 0
  %1354 = vmatpush1.bf16.msra.mxu0 0
  %1355 = vmatprep.subr.bf16.mxu0 0
  %1356 = vmatpush1.bf16.msra.mxu0 0
  %1357 = vmatprep.subr.bf16.mxu0 0
  %1358 = vmatpush1.bf16.msra.mxu0 0
  %1359 = vmatprep.subr.bf16.mxu0 0
  %1360 = vmatpush1.bf16.msra.mxu0 0
  %1361 = vmatprep.subr.bf16.mxu0 0
  %1362 = vmatpush1.bf16.msra.mxu0 0
  %1363 = vmatprep.subr.bf16.mxu0 0
  %1364 = vmatpush1.bf16.msra.mxu0 0
  %1365 = vmatprep.subr.bf16.mxu0 0
  %1366 = vmatpush1.bf16.msra.mxu0 0
  %1367 = vmatprep.subr.bf16.mxu0 0
  %1368 = vmatpush1.bf16.msra.mxu0 0
  %1369 = vmatprep.subr.bf16.mxu0 0
  %1370 = vmatpush1.bf16.msra.mxu0 0
  %1371 = vmatprep.subr.bf16.mxu0 0
  %1372 = vmatpush1.bf16.msra.mxu0 0
  %1373 = vmatprep.mubr.bf16.mxu0 0
  %1374 = vmatmul.mubr.bf16.gmra.mrb[0].mxu0 %v1339
  %v1375 = vpop.f32.mrb[0].mxu0
  %v1376 = vadd.f32 %v1321, %v1375
  %v1377 = vpop.f32.mrb[0].mxu0
  %v1378 = vpop.f32.mrb[0].mxu0
  %v1379 = vpop.f32.mrb[0].mxu0
  %1380 = vdwg.mxu0
  %1381 = vst [vmem:[%s13] sm:$0x3] %v1376
  %v1382 = vld [vmem:[#allocation3 + $0x2] sm:$0x3]
  %1383 = vmatprep.subr.bf16.mxu0 0
  %1384 = vmatpush1.bf16.msra.mxu0 %v1245
  %1385 = vmatprep.subr.bf16.mxu0 0
  %1386 = vmatpush1.bf16.msra.mxu0 %v1246
  %1387 = vmatprep.subr.bf16.mxu0 0
  %1388 = vmatpush1.bf16.msra.mxu0 0
  %1389 = vmatprep.subr.bf16.mxu0 0
  %1390 = vmatpush1.bf16.msra.mxu0 0
  %1391 = vmatprep.subr.bf16.mxu0 0
  %1392 = vmatpush1.bf16.msra.mxu0 0
  %1393 = vmatprep.subr.bf16.mxu0 0
  %1394 = vmatpush1.bf16.msra.mxu0 0
  %1395 = vmatprep.subr.bf16.mxu0 0
  %1396 = vmatpush1.bf16.msra.mxu0 0
  %1397 = vmatprep.subr.bf16.mxu0 0
  %1398 = vmatpush1.bf16.msra.mxu0 0
  %1399 = vmatprep.subr.bf16.mxu0 0
  %1400 = vmatpush1.bf16.msra.mxu0 0
  %1401 = vmatprep.subr.bf16.mxu0 0
  %1402 = vmatpush1.bf16.msra.mxu0 0
  %1403 = vmatprep.subr.bf16.mxu0 0
  %1404 = vmatpush1.bf16.msra.mxu0 0
  %1405 = vmatprep.subr.bf16.mxu0 0
  %1406 = vmatpush1.bf16.msra.mxu0 0
  %1407 = vmatprep.subr.bf16.mxu0 0
  %1408 = vmatpush1.bf16.msra.mxu0 0
  %1409 = vmatprep.subr.bf16.mxu0 0
  %1410 = vmatpush1.bf16.msra.mxu0 0
  %1411 = vmatprep.subr.bf16.mxu0 0
  %1412 = vmatpush1.bf16.msra.mxu0 0
  %1413 = vmatprep.subr.bf16.mxu0 0
  %1414 = vmatpush1.bf16.msra.mxu0 0
  %1415 = vmatprep.mubr.bf16.mxu0 0
  %1416 = vmatmul.mubr.bf16.gmra.mrb[0].mxu0 %v1339
  %v1417 = vpop.f32.mrb[0].mxu0
  %v1418 = vadd.f32 0.0, %v1417
  %v1419 = vpop.f32.mrb[0].mxu0
  %v1420 = vpop.f32.mrb[0].mxu0
  %v1421 = vpop.f32.mrb[0].mxu0
  %1422 = vdwg.mxu0
  %v1423 = vadd.f32 %v1382, %v1418
  %v1424 = vsub.f32 0.0, %v1423
  %v1425 = vmul.f32 %v1424, 1.442695
  %v1426 = vpow.pop %v1425
  %v1427 = vadd.f32 %v1426, 1.0
  %v1428 = vrcp.pop %v1427
  %v1429 = vtanh.pop %v1423
  %v1430 = vmul.f32 %v1428, %v1309
  %1432 = vrot.lane.b32.xlu0 %v1429, 32
  %v1433 = vpop.permute.xlu0 %1432
  %v1435 = vmul.f32 %v1428, %v1433
  %1437 = vrot.lane.b32.xlu0 %v1435, 32
  %v1438 = vpop.permute.xlu0 %1437
  %v1440 = vadd.f32 %v1430, %v1438
  %v1441 = vtanh.pop %v1440
  %1443 = vrot.lane.b32.xlu0 %v1441, 32
  %v1444 = vpop.permute.xlu0 %1443
  %v1446 = vmul.f32 %v1428, %v1444
  %v1447 = vpack.c.bf16 %v1446, %v1446
  %1449 = vrot.lane.b32.xlu0 %v1447, 64
  %v1450 = vpop.permute.xlu0 %1449
  %v1452 = vsel %vm444, %v1450, 0
  %1454 = vmatprep.subr.bf16.mxu0 0
  %1455 = vmatpush1.bf16.msra.mxu0 %v1334
  %1456 = vmatprep.subr.bf16.mxu0 0
  %1457 = vmatpush1.bf16.msra.mxu0 %v1335
  %1458 = vmatprep.subr.bf16.mxu0 0
  %1459 = vmatpush1.bf16.msra.mxu0 0
  %1460 = vmatprep.subr.bf16.mxu0 0
  %1461 = vmatpush1.bf16.msra.mxu0 0
  %1462 = vmatprep.subr.bf16.mxu0 0
  %1463 = vmatpush1.bf16.msra.mxu0 0
  %1464 = vmatprep.subr.bf16.mxu0 0
  %1465 = vmatpush1.bf16.msra.mxu0 0
  %1466 = vmatprep.subr.bf16.mxu0 0
  %1467 = vmatpush1.bf16.msra.mxu0 0
  %1468 = vmatprep.subr.bf16.mxu0 0
  %1469 = vmatpush1.bf16.msra.mxu0 0
  %1470 = vmatprep.subr.bf16.mxu0 0
  %1471 = vmatpush1.bf16.msra.mxu0 0
  %1472 = vmatprep.subr.bf16.mxu0 0
  %1473 = vmatpush1.bf16.msra.mxu0 0
  %1474 = vmatprep.subr.bf16.mxu0 0
  %1475 = vmatpush1.bf16.msra.mxu0 0
  %1476 = vmatprep.subr.bf16.mxu0 0
  %1477 = vmatpush1.bf16.msra.mxu0 0
  %1478 = vmatprep.subr.bf16.mxu0 0
  %1479 = vmatpush1.bf16.msra.mxu0 0
  %1480 = vmatprep.subr.bf16.mxu0 0
  %1481 = vmatpush1.bf16.msra.mxu0 0
  %1482 = vmatprep.subr.bf16.mxu0 0
  %1483 = vmatpush1.bf16.msra.mxu0 0
  %1484 = vmatprep.subr.bf16.mxu0 0
  %1485 = vmatpush1.bf16.msra.mxu0 0
  %1486 = vmatprep.mubr.bf16.mxu0 0
  %1487 = vmatmul.mubr.bf16.gmra.mrb[0].mxu0 %v1452
  %v1488 = vpop.f32.mrb[0].mxu0
  %v1489 = vadd.f32 %v1321, %v1488
  %v1490 = vpop.f32.mrb[0].mxu0
  %v1491 = vpop.f32.mrb[0].mxu0
  %v1492 = vpop.f32.mrb[0].mxu0
  %1493 = vdwg.mxu0
  %1494 = vst [vmem:[%s13 + $0x2] sm:$0x3] %v1489
  %v1495 = vld [vmem:[#allocation3 + $0x4] sm:$0x3]
  %1496 = vmatprep.subr.bf16.mxu0 0
  %1497 = vmatpush1.bf16.msra.mxu0 %v1245
  %1498 = vmatprep.subr.bf16.mxu0 0
  %1499 = vmatpush1.bf16.msra.mxu0 %v1246
  %1500 = vmatprep.subr.bf16.mxu0 0
  %1501 = vmatpush1.bf16.msra.mxu0 0
  %1502 = vmatprep.subr.bf16.mxu0 0
  %1503 = vmatpush1.bf16.msra.mxu0 0
  %1504 = vmatprep.subr.bf16.mxu0 0
  %1505 = vmatpush1.bf16.msra.mxu0 0
  %1506 = vmatprep.subr.bf16.mxu0 0
  %1507 = vmatpush1.bf16.msra.mxu0 0
  %1508 = vmatprep.subr.bf16.mxu0 0
  %1509 = vmatpush1.bf16.msra.mxu0 0
  %1510 = vmatprep.subr.bf16.mxu0 0
  %1511 = vmatpush1.bf16.msra.mxu0 0
  %1512 = vmatprep.subr.bf16.mxu0 0
  %1513 = vmatpush1.bf16.msra.mxu0 0
  %1514 = vmatprep.subr.bf16.mxu0 0
  %1515 = vmatpush1.bf16.msra.mxu0 0
  %1516 = vmatprep.subr.bf16.mxu0 0
  %1517 = vmatpush1.bf16.msra.mxu0 0
  %1518 = vmatprep.subr.bf16.mxu0 0
  %1519 = vmatpush1.bf16.msra.mxu0 0
  %1520 = vmatprep.subr.bf16.mxu0 0
  %1521 = vmatpush1.bf16.msra.mxu0 0
  %1522 = vmatprep.subr.bf16.mxu0 0
  %1523 = vmatpush1.bf16.msra.mxu0 0
  %1524 = vmatprep.subr.bf16.mxu0 0
  %1525 = vmatpush1.bf16.msra.mxu0 0
  %1526 = vmatprep.subr.bf16.mxu0 0
  %1527 = vmatpush1.bf16.msra.mxu0 0
  %1528 = vmatprep.mubr.bf16.mxu0 0
  %1529 = vmatmul.mubr.bf16.gmra.mrb[0].mxu0 %v1452
  %v1530 = vpop.f32.mrb[0].mxu0
  %v1531 = vadd.f32 0.0, %v1530
  %v1532 = vpop.f32.mrb[0].mxu0
  %v1533 = vpop.f32.mrb[0].mxu0
  %v1534 = vpop.f32.mrb[0].mxu0
  %1535 = vdwg.mxu0
  %v1536 = vadd.f32 %v1495, %v1531
  %v1537 = vsub.f32 0.0, %v1536
  %v1538 = vmul.f32 %v1537, 1.442695
  %v1539 = vpow.pop %v1538
  %v1540 = vadd.f32 %v1539, 1.0
  %v1541 = vrcp.pop %v1540
  %v1542 = vtanh.pop %v1536
  %v1543 = vmul.f32 %v1541, %v1440
  %1545 = vrot.lane.b32.xlu0 %v1542, 32
  %v1546 = vpop.permute.xlu0 %1545
  %v1548 = vmul.f32 %v1541, %v1546
  %1550 = vrot.lane.b32.xlu0 %v1548, 32
  %v1551 = vpop.permute.xlu0 %1550
  %v1553 = vadd.f32 %v1543, %v1551
  %v1554 = vtanh.pop %v1553
  %1556 = vrot.lane.b32.xlu0 %v1554, 32
  %v1557 = vpop.permute.xlu0 %1556
  %v1559 = vmul.f32 %v1541, %v1557
  %v1560 = vpack.c.bf16 %v1559, %v1559
  %1562 = vrot.lane.b32.xlu0 %v1560, 64
  %v1563 = vpop.permute.xlu0 %1562
  %v1565 = vsel %vm444, %v1563, 0
  %1567 = vmatprep.subr.bf16.mxu0 0
  %1568 = vmatpush1.bf16.msra.mxu0 %v1334
  %1569 = vmatprep.subr.bf16.mxu0 0
  %1570 = vmatpush1.bf16.msra.mxu0 %v1335
  %1571 = vmatprep.subr.bf16.mxu0 0
  %1572 = vmatpush1.bf16.msra.mxu0 0
  %1573 = vmatprep.subr.bf16.mxu0 0
  %1574 = vmatpush1.bf16.msra.mxu0 0
  %1575 = vmatprep.subr.bf16.mxu0 0
  %1576 = vmatpush1.bf16.msra.mxu0 0
  %1577 = vmatprep.subr.bf16.mxu0 0
  %1578 = vmatpush1.bf16.msra.mxu0 0
  %1579 = vmatprep.subr.bf16.mxu0 0
  %1580 = vmatpush1.bf16.msra.mxu0 0
  %1581 = vmatprep.subr.bf16.mxu0 0
  %1582 = vmatpush1.bf16.msra.mxu0 0
  %1583 = vmatprep.subr.bf16.mxu0 0
  %1584 = vmatpush1.bf16.msra.mxu0 0
  %1585 = vmatprep.subr.bf16.mxu0 0
  %1586 = vmatpush1.bf16.msra.mxu0 0
  %1587 = vmatprep.subr.bf16.mxu0 0
  %1588 = vmatpush1.bf16.msra.mxu0 0
  %1589 = vmatprep.subr.bf16.mxu0 0
  %1590 = vmatpush1.bf16.msra.mxu0 0
  %1591 = vmatprep.subr.bf16.mxu0 0
  %1592 = vmatpush1.bf16.msra.mxu0 0
  %1593 = vmatprep.subr.bf16.mxu0 0
  %1594 = vmatpush1.bf16.msra.mxu0 0
  %1595 = vmatprep.subr.bf16.mxu0 0
  %1596 = vmatpush1.bf16.msra.mxu0 0
  %1597 = vmatprep.subr.bf16.mxu0 0
  %1598 = vmatpush1.bf16.msra.mxu0 0
  %1599 = vmatprep.mubr.bf16.mxu0 0
  %1600 = vmatmul.mubr.bf16.gmra.mrb[0].mxu0 %v1565
  %v1601 = vpop.f32.mrb[0].mxu0
  %v1602 = vadd.f32 %v1321, %v1601
  %v1603 = vpop.f32.mrb[0].mxu0
  %v1604 = vpop.f32.mrb[0].mxu0
  %v1605 = vpop.f32.mrb[0].mxu0
  %1606 = vdwg.mxu0
  %1607 = vst [vmem:[%s13 + $0x4] sm:$0x3] %v1602
  %v1608 = vld [vmem:[#allocation3 + $0x6] sm:$0x3]
  %1609 = vmatprep.subr.bf16.mxu0 0
  %1610 = vmatpush1.bf16.msra.mxu0 %v1245
  %1611 = vmatprep.subr.bf16.mxu0 0
  %1612 = vmatpush1.bf16.msra.mxu0 %v1246
  %1613 = vmatprep.subr.bf16.mxu0 0
  %1614 = vmatpush1.bf16.msra.mxu0 0
  %1615 = vmatprep.subr.bf16.mxu0 0
  %1616 = vmatpush1.bf16.msra.mxu0 0
  %1617 = vmatprep.subr.bf16.mxu0 0
  %1618 = vmatpush1.bf16.msra.mxu0 0
  %1619 = vmatprep.subr.bf16.mxu0 0
  %1620 = vmatpush1.bf16.msra.mxu0 0
  %1621 = vmatprep.subr.bf16.mxu0 0
  %1622 = vmatpush1.bf16.msra.mxu0 0
  %1623 = vmatprep.subr.bf16.mxu0 0
  %1624 = vmatpush1.bf16.msra.mxu0 0
  %1625 = vmatprep.subr.bf16.mxu0 0
  %1626 = vmatpush1.bf16.msra.mxu0 0
  %1627 = vmatprep.subr.bf16.mxu0 0
  %1628 = vmatpush1.bf16.msra.mxu0 0
  %1629 = vmatprep.subr.bf16.mxu0 0
  %1630 = vmatpush1.bf16.msra.mxu0 0
  %1631 = vmatprep.subr.bf16.mxu0 0
  %1632 = vmatpush1.bf16.msra.mxu0 0
  %1633 = vmatprep.subr.bf16.mxu0 0
  %1634 = vmatpush1.bf16.msra.mxu0 0
  %1635 = vmatprep.subr.bf16.mxu0 0
  %1636 = vmatpush1.bf16.msra.mxu0 0
  %1637 = vmatprep.subr.bf16.mxu0 0
  %1638 = vmatpush1.bf16.msra.mxu0 0
  %1639 = vmatprep.subr.bf16.mxu0 0
  %1640 = vmatpush1.bf16.msra.mxu0 0
  %1641 = vmatprep.mubr.bf16.mxu0 0
  %1642 = vmatmul.mubr.bf16.gmra.mrb[0].mxu0 %v1565
  %v1643 = vpop.f32.mrb[0].mxu0
  %v1644 = vadd.f32 0.0, %v1643
  %v1645 = vpop.f32.mrb[0].mxu0
  %v1646 = vpop.f32.mrb[0].mxu0
  %v1647 = vpop.f32.mrb[0].mxu0
  %1648 = vdwg.mxu0
  %v1649 = vadd.f32 %v1608, %v1644
  %v1650 = vsub.f32 0.0, %v1649
  %v1651 = vmul.f32 %v1650, 1.442695
  %v1652 = vpow.pop %v1651
  %v1653 = vadd.f32 %v1652, 1.0
  %v1654 = vrcp.pop %v1653
  %v1655 = vtanh.pop %v1649
  %v1656 = vmul.f32 %v1654, %v1553
  %1658 = vrot.lane.b32.xlu0 %v1655, 32
  %v1659 = vpop.permute.xlu0 %1658
  %v1661 = vmul.f32 %v1654, %v1659
  %1663 = vrot.lane.b32.xlu0 %v1661, 32
  %v1664 = vpop.permute.xlu0 %1663
  %v1666 = vadd.f32 %v1656, %v1664
  %v1667 = vtanh.pop %v1666
  %1669 = vrot.lane.b32.xlu0 %v1667, 32
  %v1670 = vpop.permute.xlu0 %1669
  %v1672 = vmul.f32 %v1654, %v1670
  %v1673 = vpack.c.bf16 %v1672, %v1672
  %1675 = vrot.lane.b32.xlu0 %v1673, 64
  %v1676 = vpop.permute.xlu0 %1675
  %v1678 = vsel %vm444, %v1676, 0
  %1680 = vmatprep.subr.bf16.mxu0 0
  %1681 = vmatpush1.bf16.msra.mxu0 %v1334
  %1682 = vmatprep.subr.bf16.mxu0 0
  %1683 = vmatpush1.bf16.msra.mxu0 %v1335
  %1684 = vmatprep.subr.bf16.mxu0 0
  %1685 = vmatpush1.bf16.msra.mxu0 0
  %1686 = vmatprep.subr.bf16.mxu0 0
  %1687 = vmatpush1.bf16.msra.mxu0 0
  %1688 = vmatprep.subr.bf16.mxu0 0
  %1689 = vmatpush1.bf16.msra.mxu0 0
  %1690 = vmatprep.subr.bf16.mxu0 0
  %1691 = vmatpush1.bf16.msra.mxu0 0
  %1692 = vmatprep.subr.bf16.mxu0 0
  %1693 = vmatpush1.bf16.msra.mxu0 0
  %1694 = vmatprep.subr.bf16.mxu0 0
  %1695 = vmatpush1.bf16.msra.mxu0 0
  %1696 = vmatprep.subr.bf16.mxu0 0
  %1697 = vmatpush1.bf16.msra.mxu0 0
  %1698 = vmatprep.subr.bf16.mxu0 0
  %1699 = vmatpush1.bf16.msra.mxu0 0
  %1700 = vmatprep.subr.bf16.mxu0 0
  %1701 = vmatpush1.bf16.msra.mxu0 0
  %1702 = vmatprep.subr.bf16.mxu0 0
  %1703 = vmatpush1.bf16.msra.mxu0 0
  %1704 = vmatprep.subr.bf16.mxu0 0
  %1705 = vmatpush1.bf16.msra.mxu0 0
  %1706 = vmatprep.subr.bf16.mxu0 0
  %1707 = vmatpush1.bf16.msra.mxu0 0
  %1708 = vmatprep.subr.bf16.mxu0 0
  %1709 = vmatpush1.bf16.msra.mxu0 0
  %1710 = vmatprep.subr.bf16.mxu0 0
  %1711 = vmatpush1.bf16.msra.mxu0 0
  %1712 = vmatprep.mubr.bf16.mxu0 0
  %1713 = vmatmul.mubr.bf16.gmra.mrb[0].mxu0 %v1678
  %v1714 = vpop.f32.mrb[0].mxu0
  %v1715 = vadd.f32 %v1321, %v1714
  %v1716 = vpop.f32.mrb[0].mxu0
  %v1717 = vpop.f32.mrb[0].mxu0
  %v1718 = vpop.f32.mrb[0].mxu0
  %1719 = vdwg.mxu0
  %1720 = vst [vmem:[%s13 + $0x6] sm:$0x3] %v1715
  %v1721 = vld [vmem:[#allocation3 + $0x8] sm:$0x3]
  %1722 = vmatprep.subr.bf16.mxu0 0
  %1723 = vmatpush1.bf16.msra.mxu0 %v1245
  %1724 = vmatprep.subr.bf16.mxu0 0
  %1725 = vmatpush1.bf16.msra.mxu0 %v1246
  %1726 = vmatprep.subr.bf16.mxu0 0
  %1727 = vmatpush1.bf16.msra.mxu0 0
  %1728 = vmatprep.subr.bf16.mxu0 0
  %1729 = vmatpush1.bf16.msra.mxu0 0
  %1730 = vmatprep.subr.bf16.mxu0 0
  %1731 = vmatpush1.bf16.msra.mxu0 0
  %1732 = vmatprep.subr.bf16.mxu0 0
  %1733 = vmatpush1.bf16.msra.mxu0 0
  %1734 = vmatprep.subr.bf16.mxu0 0
  %1735 = vmatpush1.bf16.msra.mxu0 0
  %1736 = vmatprep.subr.bf16.mxu0 0
  %1737 = vmatpush1.bf16.msra.mxu0 0
  %1738 = vmatprep.subr.bf16.mxu0 0
  %1739 = vmatpush1.bf16.msra.mxu0 0
  %1740 = vmatprep.subr.bf16.mxu0 0
  %1741 = vmatpush1.bf16.msra.mxu0 0
  %1742 = vmatprep.subr.bf16.mxu0 0
  %1743 = vmatpush1.bf16.msra.mxu0 0
  %1744 = vmatprep.subr.bf16.mxu0 0
  %1745 = vmatpush1.bf16.msra.mxu0 0
  %1746 = vmatprep.subr.bf16.mxu0 0
  %1747 = vmatpush1.bf16.msra.mxu0 0
  %1748 = vmatprep.subr.bf16.mxu0 0
  %1749 = vmatpush1.bf16.msra.mxu0 0
  %1750 = vmatprep.subr.bf16.mxu0 0
  %1751 = vmatpush1.bf16.msra.mxu0 0
  %1752 = vmatprep.subr.bf16.mxu0 0
  %1753 = vmatpush1.bf16.msra.mxu0 0
  %1754 = vmatprep.mubr.bf16.mxu0 0
  %1755 = vmatmul.mubr.bf16.gmra.mrb[0].mxu0 %v1678
  %v1756 = vpop.f32.mrb[0].mxu0
  %v1757 = vadd.f32 0.0, %v1756
  %v1758 = vpop.f32.mrb[0].mxu0
  %v1759 = vpop.f32.mrb[0].mxu0
  %v1760 = vpop.f32.mrb[0].mxu0
  %1761 = vdwg.mxu0
  %v1762 = vadd.f32 %v1721, %v1757
  %v1763 = vsub.f32 0.0, %v1762
  %v1764 = vmul.f32 %v1763, 1.442695
  %v1765 = vpow.pop %v1764
  %v1766 = vadd.f32 %v1765, 1.0
  %v1767 = vrcp.pop %v1766
  %v1768 = vtanh.pop %v1762
  %v1769 = vmul.f32 %v1767, %v1666
  %1771 = vrot.lane.b32.xlu0 %v1768, 32
  %v1772 = vpop.permute.xlu0 %1771
  %v1774 = vmul.f32 %v1767, %v1772
  %1776 = vrot.lane.b32.xlu0 %v1774, 32
  %v1777 = vpop.permute.xlu0 %1776
  %v1779 = vadd.f32 %v1769, %v1777
  %v1780 = vtanh.pop %v1779
  %1782 = vrot.lane.b32.xlu0 %v1780, 32
  %v1783 = vpop.permute.xlu0 %1782
  %v1785 = vmul.f32 %v1767, %v1783
  %v1786 = vpack.c.bf16 %v1785, %v1785
  %1788 = vrot.lane.b32.xlu0 %v1786, 64
  %v1789 = vpop.permute.xlu0 %1788
  %v1791 = vsel %vm444, %v1789, 0
  %1793 = vmatprep.subr.bf16.mxu0 0
  %1794 = vmatpush1.bf16.msra.mxu0 %v1334
  %1795 = vmatprep.subr.bf16.mxu0 0
  %1796 = vmatpush1.bf16.msra.mxu0 %v1335
  %1797 = vmatprep.subr.bf16.mxu0 0
  %1798 = vmatpush1.bf16.msra.mxu0 0
  %1799 = vmatprep.subr.bf16.mxu0 0
  %1800 = vmatpush1.bf16.msra.mxu0 0
  %1801 = vmatprep.subr.bf16.mxu0 0
  %1802 = vmatpush1.bf16.msra.mxu0 0
  %1803 = vmatprep.subr.bf16.mxu0 0
  %1804 = vmatpush1.bf16.msra.mxu0 0
  %1805 = vmatprep.subr.bf16.mxu0 0
  %1806 = vmatpush1.bf16.msra.mxu0 0
  %1807 = vmatprep.subr.bf16.mxu0 0
  %1808 = vmatpush1.bf16.msra.mxu0 0
  %1809 = vmatprep.subr.bf16.mxu0 0
  %1810 = vmatpush1.bf16.msra.mxu0 0
  %1811 = vmatprep.subr.bf16.mxu0 0
  %1812 = vmatpush1.bf16.msra.mxu0 0
  %1813 = vmatprep.subr.bf16.mxu0 0
  %1814 = vmatpush1.bf16.msra.mxu0 0
  %1815 = vmatprep.subr.bf16.mxu0 0
  %1816 = vmatpush1.bf16.msra.mxu0 0
  %1817 = vmatprep.subr.bf16.mxu0 0
  %1818 = vmatpush1.bf16.msra.mxu0 0
  %1819 = vmatprep.subr.bf16.mxu0 0
  %1820 = vmatpush1.bf16.msra.mxu0 0
  %1821 = vmatprep.subr.bf16.mxu0 0
  %1822 = vmatpush1.bf16.msra.mxu0 0
  %1823 = vmatprep.subr.bf16.mxu0 0
  %1824 = vmatpush1.bf16.msra.mxu0 0
  %1825 = vmatprep.mubr.bf16.mxu0 0
  %1826 = vmatmul.mubr.bf16.gmra.mrb[0].mxu0 %v1791
  %v1827 = vpop.f32.mrb[0].mxu0
  %v1828 = vadd.f32 %v1321, %v1827
  %v1829 = vpop.f32.mrb[0].mxu0
  %v1830 = vpop.f32.mrb[0].mxu0
  %v1831 = vpop.f32.mrb[0].mxu0
  %1832 = vdwg.mxu0
  %1833 = vst [vmem:[%s13 + $0x8] sm:$0x3] %v1828
  %v1834 = vld [vmem:[#allocation3 + $0xa] sm:$0x3]
  %1835 = vmatprep.subr.bf16.mxu0 0
  %1836 = vmatpush1.bf16.msra.mxu0 %v1245
  %1837 = vmatprep.subr.bf16.mxu0 0
  %1838 = vmatpush1.bf16.msra.mxu0 %v1246
  %1839 = vmatprep.subr.bf16.mxu0 0
  %1840 = vmatpush1.bf16.msra.mxu0 0
  %1841 = vmatprep.subr.bf16.mxu0 0
  %1842 = vmatpush1.bf16.msra.mxu0 0
  %1843 = vmatprep.subr.bf16.mxu0 0
  %1844 = vmatpush1.bf16.msra.mxu0 0
  %1845 = vmatprep.subr.bf16.mxu0 0
  %1846 = vmatpush1.bf16.msra.mxu0 0
  %1847 = vmatprep.subr.bf16.mxu0 0
  %1848 = vmatpush1.bf16.msra.mxu0 0
  %1849 = vmatprep.subr.bf16.mxu0 0
  %1850 = vmatpush1.bf16.msra.mxu0 0
  %1851 = vmatprep.subr.bf16.mxu0 0
  %1852 = vmatpush1.bf16.msra.mxu0 0
  %1853 = vmatprep.subr.bf16.mxu0 0
  %1854 = vmatpush1.bf16.msra.mxu0 0
  %1855 = vmatprep.subr.bf16.mxu0 0
  %1856 = vmatpush1.bf16.msra.mxu0 0
  %1857 = vmatprep.subr.bf16.mxu0 0
  %1858 = vmatpush1.bf16.msra.mxu0 0
  %1859 = vmatprep.subr.bf16.mxu0 0
  %1860 = vmatpush1.bf16.msra.mxu0 0
  %1861 = vmatprep.subr.bf16.mxu0 0
  %1862 = vmatpush1.bf16.msra.mxu0 0
  %1863 = vmatprep.subr.bf16.mxu0 0
  %1864 = vmatpush1.bf16.msra.mxu0 0
  %1865 = vmatprep.subr.bf16.mxu0 0
  %1866 = vmatpush1.bf16.msra.mxu0 0
  %1867 = vmatprep.mubr.bf16.mxu0 0
  %1868 = vmatmul.mubr.bf16.gmra.mrb[0].mxu0 %v1791
  %v1869 = vpop.f32.mrb[0].mxu0
  %v1870 = vadd.f32 0.0, %v1869
  %v1871 = vpop.f32.mrb[0].mxu0
  %v1872 = vpop.f32.mrb[0].mxu0
  %v1873 = vpop.f32.mrb[0].mxu0
  %1874 = vdwg.mxu0
  %v1875 = vadd.f32 %v1834, %v1870
  %v1876 = vsub.f32 0.0, %v1875
  %v1877 = vmul.f32 %v1876, 1.442695
  %v1878 = vpow.pop %v1877
  %v1879 = vadd.f32 %v1878, 1.0
  %v1880 = vrcp.pop %v1879
  %v1881 = vtanh.pop %v1875
  %v1882 = vmul.f32 %v1880, %v1779
  %1884 = vrot.lane.b32.xlu0 %v1881, 32
  %v1885 = vpop.permute.xlu0 %1884
  %v1887 = vmul.f32 %v1880, %v1885
  %1889 = vrot.lane.b32.xlu0 %v1887, 32
  %v1890 = vpop.permute.xlu0 %1889
  %v1892 = vadd.f32 %v1882, %v1890
  %v1893 = vtanh.pop %v1892
  %1895 = vrot.lane.b32.xlu0 %v1893, 32
  %v1896 = vpop.permute.xlu0 %1895
  %v1898 = vmul.f32 %v1880, %v1896
  %v1899 = vpack.c.bf16 %v1898, %v1898
  %1901 = vrot.lane.b32.xlu0 %v1899, 64
  %v1902 = vpop.permute.xlu0 %1901
  %v1904 = vsel %vm444, %v1902, 0
  %1906 = vmatprep.subr.bf16.mxu0 0
  %1907 = vmatpush1.bf16.msra.mxu0 %v1334
  %1908 = vmatprep.subr.bf16.mxu0 0
  %1909 = vmatpush1.bf16.msra.mxu0 %v1335
  %1910 = vmatprep.subr.bf16.mxu0 0
  %1911 = vmatpush1.bf16.msra.mxu0 0
  %1912 = vmatprep.subr.bf16.mxu0 0
  %1913 = vmatpush1.bf16.msra.mxu0 0
  %1914 = vmatprep.subr.bf16.mxu0 0
  %1915 = vmatpush1.bf16.msra.mxu0 0
  %1916 = vmatprep.subr.bf16.mxu0 0
  %1917 = vmatpush1.bf16.msra.mxu0 0
  %1918 = vmatprep.subr.bf16.mxu0 0
  %1919 = vmatpush1.bf16.msra.mxu0 0
  %1920 = vmatprep.subr.bf16.mxu0 0
  %1921 = vmatpush1.bf16.msra.mxu0 0
  %1922 = vmatprep.subr.bf16.mxu0 0
  %1923 = vmatpush1.bf16.msra.mxu0 0
  %1924 = vmatprep.subr.bf16.mxu0 0
  %1925 = vmatpush1.bf16.msra.mxu0 0
  %1926 = vmatprep.subr.bf16.mxu0 0
  %1927 = vmatpush1.bf16.msra.mxu0 0
  %1928 = vmatprep.subr.bf16.mxu0 0
  %1929 = vmatpush1.bf16.msra.mxu0 0
  %1930 = vmatprep.subr.bf16.mxu0 0
  %1931 = vmatpush1.bf16.msra.mxu0 0
  %1932 = vmatprep.subr.bf16.mxu0 0
  %1933 = vmatpush1.bf16.msra.mxu0 0
  %1934 = vmatprep.subr.bf16.mxu0 0
  %1935 = vmatpush1.bf16.msra.mxu0 0
  %1936 = vmatprep.subr.bf16.mxu0 0
  %1937 = vmatpush1.bf16.msra.mxu0 0
  %1938 = vmatprep.mubr.bf16.mxu0 0
  %1939 = vmatmul.mubr.bf16.gmra.mrb[0].mxu0 %v1904
  %v1940 = vpop.f32.mrb[0].mxu0
  %v1941 = vadd.f32 %v1321, %v1940
  %v1942 = vpop.f32.mrb[0].mxu0
  %v1943 = vpop.f32.mrb[0].mxu0
  %v1944 = vpop.f32.mrb[0].mxu0
  %1945 = vdwg.mxu0
  %1946 = vst [vmem:[%s13 + $0xa] sm:$0x3] %v1941
  // Predicated region
  $region50: #{encoder_decoder_forward.1} parent=0 // pred_check
    _
  $region51: #{encoder_decoder_forward.1} parent=0 // pred_check_branch
    %1948 = sbr.rel (0) target = $region53
  $region52: #{encoder_decoder_forward.1} parent=0 // pred_region
    _
  $region53: #{encoder_decoder_forward.1} parent=0 // pred_fallthru
    _
  // Predicated region
  $region54: #{encoder_decoder_forward.1} parent=0 // pred_check
    _
  $region55: #{encoder_decoder_forward.1} parent=0 // pred_check_branch
    %1950 = sbr.rel (0) target = $region57
  $region56: #{encoder_decoder_forward.1} parent=0 // pred_region
    _
  $region57: #{encoder_decoder_forward.1} parent=0 // pred_fallthru
    _

</llo_original>
